<compile_context>
chip_gen: v7x
topology: tpu7x:2x2x1
jax: 0.10.0
libtpu: 0.0.40
codegen_flags: <defaults>
</compile_context>

<pallas_src>
import functools

import jax
import jax.numpy as jnp
from jax.experimental import pallas as pl
from jax.experimental.pallas import tpu as pltpu


def _inception_kernel(x_ref, w_ref, b_ref, o_ref, acc_ref, *, kh_size,
                      row_tile):
    """One (batch x row-tile) grid step of the folded & averaged KHxKW conv.

    x_ref:   (row_tile+KH-1, W, KWC_pad)  bf16 halo'd, KW-unfolded row slab
    w_ref:   (KH, KWC_pad, Cout)          bf16 folded + averaged weights
    b_ref:   (1, 1, Cout)                 f32 averaged bias
    o_ref:   (row_tile, W, Cout)          f32 output row tile (lane-dense)
    acc_ref: (row_tile, W, Cout)          f32 VMEM accumulator scratch
    """
    for kh in range(kh_size):
        # Static leading-dim slice: pure address offset, no lane/sublane
        # shuffling.  Each dot is (row_tile*W, KWC_pad) @ (KWC_pad, Cout)
        # in bf16 with f32 accumulation.
        contrib = jax.lax.dot_general(
            x_ref[kh:kh + row_tile, :, :], w_ref[kh],
            dimension_numbers=(((2,), (0,)), ((), ())),
            preferred_element_type=jnp.float32)
        if kh == 0:
            acc_ref[...] = contrib
        else:
            acc_ref[...] += contrib
    # 1/num_branches is already folded into w_ref / b_ref on the host.
    o_ref[...] = (acc_ref[...] + b_ref[...]).astype(o_ref.dtype)


def _tile_padded_bytes(shape, dtype):
    """Bytes of a VMEM block after (sublane, 128)-lane tile padding.

    Sublane tile is dtype-dependent: 8 rows for 4-byte, 16 for 2-byte,
    32 for 1-byte dtypes.
    """
    d = jnp.dtype(dtype)
    sublane = {4: 8, 2: 16, 1: 32}.get(d.itemsize, 8)
    s = list(shape)
    s[-1] = -(-s[-1] // 128) * 128
    if len(s) >= 2:
        s[-2] = -(-s[-2] // sublane) * sublane
    n = 1
    for v in s:
        n *= v
    return n * d.itemsize


def inception_block_v2_pallas(x_nhwc, w_avg, b_avg, *, row_tile=8):
    """Fused Inception_Block_V2 forward.

    x_nhwc: (N, H, W, Cin)                f32
    w_avg:  (KH, KW, Cin, Cout)           sum of centered branch kernels / B
    b_avg:  (Cout,)                       sum of branch biases / B
    """
    N, H, W, Cin = x_nhwc.shape
    KH, KW, _, Cout = w_avg.shape
    assert H % row_tile == 0, "demo wrapper assumes H % row_tile == 0"

    ph, pw = KH // 2, KW // 2
    n_tiles = H // row_tile
    rows = row_tile + KH - 1                    # halo'd rows per tile
    KWC = KW * Cin
    KWC_pad = -(-KWC // 128) * 128              # lane-align the contraction dim

    # ---- host-side prep: pad, unfold KW into lanes, halo-duplicate rows ----
    xp = jnp.pad(x_nhwc, ((0, 0), (ph, ph), (pw, pw), (0, 0)))   # (N,Hp,Wp,Cin)
    # (N, Hp, W, KW*Cin): xcols[n,h,w, kw*Cin+ci] = xp[n, h, w+kw, ci]
    xcols = jnp.concatenate([xp[:, :, kw:kw + W, :] for kw in range(KW)],
                            axis=-1)
    xcols = jnp.pad(xcols, ((0, 0), (0, 0), (0, 0), (0, KWC_pad - KWC)))
    # Halo-duplicated row tiles -> (N*n_tiles, rows, W, KWC_pad), bf16.
    xtiles = jnp.stack(
        [xcols[:, i * row_tile:i * row_tile + rows] for i in range(n_tiles)],
        axis=1).reshape(N * n_tiles, rows, W, KWC_pad).astype(jnp.bfloat16)

    # Weights: fold KW into the contraction axis, lane-pad, bf16.  Bias f32.
    w2 = w_avg.reshape(KH, KWC, Cout)
    w2 = jnp.pad(w2, ((0, 0), (0, KWC_pad - KWC), (0, 0))).astype(jnp.bfloat16)
    b2 = b_avg.reshape(1, 1, Cout).astype(jnp.float32)

    kernel = functools.partial(_inception_kernel, kh_size=KH,
                               row_tile=row_tile)

    # ---- VMEM budget: double-buffered pipeline blocks + single scratch ----
    block_bytes = (_tile_padded_bytes((rows, W, KWC_pad), jnp.bfloat16)
                   + _tile_padded_bytes((KH, KWC_pad, Cout), jnp.bfloat16)
                   + _tile_padded_bytes((1, 1, Cout), jnp.float32)
                   + _tile_padded_bytes((row_tile, W, Cout), jnp.float32))
    needed = 2 * block_bytes + _tile_padded_bytes((row_tile, W, Cout),
                                                  jnp.float32)
    try:
        vmem_cap = int(pltpu.get_tpu_info().vmem_capacity_bytes)
    except Exception:
        vmem_cap = 64 << 20                     # conservative (v7x-sized) cap
    vmem_limit = min(vmem_cap - (8 << 20), needed + (16 << 20))
    vmem_limit = max(vmem_limit, needed + (2 << 20))
    vmem_limit = int(min(vmem_limit, vmem_cap))

    out = pl.pallas_call(
        kernel,
        out_shape=jax.ShapeDtypeStruct((N * n_tiles, row_tile, W, Cout),
                                       jnp.float32),
        grid=(N * n_tiles,),
        in_specs=[
            # One aligned, halo'd bf16 slab per grid step (prefetched by the
            # default double-buffered pipeline).
            pl.BlockSpec((None, rows, W, KWC_pad), lambda t: (t, 0, 0, 0)),
            # Revisited constants (same block every step -> DMA'd once).
            pl.BlockSpec((KH, KWC_pad, Cout), lambda t: (0, 0, 0)),
            pl.BlockSpec((1, 1, Cout), lambda t: (0, 0, 0)),
        ],
        out_specs=pl.BlockSpec((None, row_tile, W, Cout),
                               lambda t: (t, 0, 0, 0)),
        scratch_shapes=[pltpu.VMEM((row_tile, W, Cout), jnp.float32)],
        compiler_params=pltpu.CompilerParams(
            dimension_semantics=("parallel",),
            vmem_limit_bytes=vmem_limit),
    )(xtiles, w2, b2)

    return out.reshape(N, H, W, Cout)


def make_params(key, in_channels, out_channels, num_kernels=6):
    """Branch conv params exactly like the PyTorch module (kaiming_normal_
    fan_out/relu weights, zero biases), plus the folded/averaged kernel."""
    specs = []
    for i in range(num_kernels // 2):
        specs.append((1, 2 * i + 3))
        specs.append((2 * i + 3, 1))
    specs.append((1, 1))
    num_branches = len(specs)                      # num_kernels + 1

    max_k = 2 * (num_kernels // 2) + 1             # 7 for num_kernels=6
    branch_w, branch_b = [], []
    w_sum = jnp.zeros((max_k, max_k, in_channels, out_channels), jnp.float32)
    b_sum = jnp.zeros((out_channels,), jnp.float32)
    for (kh, kw) in specs:
        key, sub = jax.random.split(key)
        fan_out = out_channels * kh * kw
        std = (2.0 / fan_out) ** 0.5
        w = jax.random.normal(sub, (kh, kw, in_channels, out_channels),
                              jnp.float32) * std   # HWIO layout
        b = jnp.zeros((out_channels,), jnp.float32)  # module inits bias to 0
        branch_w.append(w)
        branch_b.append(b)
        oh, ow = (max_k - kh) // 2, (max_k - kw) // 2
        w_sum = w_sum.at[oh:oh + kh, ow:ow + kw].add(w)
        b_sum = b_sum + b

    # The module averages branch outputs (incl. each branch's bias), so fold
    # 1/num_branches into BOTH the combined weights and bias here.
    w_avg = w_sum / num_branches
    b_avg = b_sum / num_branches
    return specs, branch_w, branch_b, w_avg, b_avg


def reference_forward(x_nhwc, specs, branch_w, branch_b):
    """Pure-JAX f32 reference: mean over the individual same-padded convs
    (each branch adds its own bias before averaging, like the module)."""
    acc = 0.0
    for (kh, kw), w, b in zip(specs, branch_w, branch_b):
        y = jax.lax.conv_general_dilated(
            x_nhwc, w, window_strides=(1, 1),
            padding=((kh // 2, kh // 2), (kw // 2, kw // 2)),
            dimension_numbers=('NHWC', 'HWIO', 'NHWC'),
            precision=jax.lax.Precision.HIGHEST)
        acc = acc + y + b.reshape(1, 1, 1, -1)
    return acc / len(specs)


if __name__ == "__main__":
    key = jax.random.PRNGKey(0)
    # Small but MXU/lane-friendly demo shapes (d_model=32 -> d_ff=128, 16x16).
    N, C_in, H, W = 2, 32, 16, 16
    C_out = 128
    num_kernels = 6

    k_x, k_w = jax.random.split(key)
    # PyTorch-convention NCHW input, transposed to NHWC for the kernel.
    x_nchw = jax.random.normal(k_x, (N, C_in, H, W), jnp.float32)
    x_nhwc = jnp.transpose(x_nchw, (0, 2, 3, 1))

    specs, branch_w, branch_b, w_avg, b_avg = make_params(
        k_w, C_in, C_out, num_kernels=num_kernels)

    out_nhwc = inception_block_v2_pallas(x_nhwc, w_avg, b_avg, row_tile=8)
    out_nhwc = jax.block_until_ready(out_nhwc)

    # Check against a pure-JAX f32 reference of the original 7-branch mean.
    # Tolerance loosened for the bf16 operand cast (f32 accumulation).
    ref_nhwc = reference_forward(x_nhwc, specs, branch_w, branch_b)
    assert out_nhwc.shape == (N, H, W, C_out)
    max_err = float(jnp.max(jnp.abs(out_nhwc - ref_nhwc)))
    assert jnp.allclose(out_nhwc, ref_nhwc, atol=3e-2, rtol=3e-2), max_err

    # NCHW output, matching the PyTorch module's convention.
    out_nchw = jnp.transpose(out_nhwc, (0, 3, 1, 2))
    jax.block_until_ready(out_nchw)

    print("KERNEL_OK")
</pallas_src>

<mosaic_0001>
module attributes {stable_mosaic.version = 11 : i64} {
  func.func @_inception_kernel(%arg0: i32, %arg1: memref<1x14x16x256xbf16, #tpu.memory_space<vmem>>, %arg2: memref<7x256x128xbf16, #tpu.memory_space<vmem>>, %arg3: memref<1x1x128xf32, #tpu.memory_space<vmem>>, %arg4: memref<1x8x16x128xf32, #tpu.memory_space<vmem>>, %arg5: memref<8x16x128xf32, #tpu.memory_space<vmem>>) attributes {dimension_semantics = [#tpu.dimension_semantics<parallel>], iteration_bounds = array<i64: 4>, scalar_prefetch = 0 : i64, scratch_operands = 1 : i64, tpu.core_type = #tpu.core_type<tc>, window_params = [{transform_indices = @transform_0, window_bounds = array<i64: 1, 14, 16, 256>}, {pipeline_mode = #tpu.pipeline_mode<synchronous>, transform_indices = @transform_1, window_bounds = array<i64: 7, 256, 128>}, {pipeline_mode = #tpu.pipeline_mode<synchronous>, transform_indices = @transform_2, window_bounds = array<i64: 1, 1, 128>}, {transform_indices = @transform_3, window_bounds = array<i64: 1, 8, 16, 128>}]} {
    %c0 = arith.constant 0 : index
    %c0_0 = arith.constant 0 : index
    %c0_1 = arith.constant 0 : index
    %c0_2 = arith.constant 0 : index
    %0 = vector.load %arg1[%c0, %c0_0, %c0_1, %c0_2] : memref<1x14x16x256xbf16, #tpu.memory_space<vmem>>, vector<1x8x16x256xbf16>
    %1 = vector.shape_cast %0 : vector<1x8x16x256xbf16> to vector<8x16x256xbf16>
    %c0_3 = arith.constant 0 : index
    %c0_4 = arith.constant 0 : index
    %c0_5 = arith.constant 0 : index
    %2 = vector.load %arg2[%c0_3, %c0_4, %c0_5] : memref<7x256x128xbf16, #tpu.memory_space<vmem>>, vector<1x256x128xbf16>
    %3 = vector.shape_cast %2 : vector<1x256x128xbf16> to vector<256x128xbf16>
    %cst = arith.constant dense<0.000000e+00> : vector<8x16x128xf32>
    %4 = tpu.matmul %1, %3, %cst {dimension_numbers = #tpu.dot_dimension_numbers<[2], [0], [0, 1], [1], [0, 0, 0, 1, 1, 1], [], []>} : vector<8x16x256xbf16>, vector<256x128xbf16>, vector<8x16x128xf32> -> vector<8x16x128xf32>
    %c0_6 = arith.constant 0 : index
    %c0_7 = arith.constant 0 : index
    %c0_8 = arith.constant 0 : index
    %5 = vector.load %arg5[%c0_6, %c0_7, %c0_8] : memref<8x16x128xf32, #tpu.memory_space<vmem>>, vector<8x16x128xf32>
    tpu.vector_store %arg5[%c0_6, %c0_7, %c0_8], %4 {strides = array<i32>} : memref<8x16x128xf32, #tpu.memory_space<vmem>>, vector<8x16x128xf32>,
    %c0_9 = arith.constant 0 : index
    %c1 = arith.constant 1 : index
    %c0_10 = arith.constant 0 : index
    %c0_11 = arith.constant 0 : index
    %6 = vector.load %arg1[%c0_9, %c1, %c0_10, %c0_11] : memref<1x14x16x256xbf16, #tpu.memory_space<vmem>>, vector<1x8x16x256xbf16>
    %7 = vector.shape_cast %6 : vector<1x8x16x256xbf16> to vector<8x16x256xbf16>
    %c1_12 = arith.constant 1 : index
    %c0_13 = arith.constant 0 : index
    %c0_14 = arith.constant 0 : index
    %8 = vector.load %arg2[%c1_12, %c0_13, %c0_14] : memref<7x256x128xbf16, #tpu.memory_space<vmem>>, vector<1x256x128xbf16>
    %9 = vector.shape_cast %8 : vector<1x256x128xbf16> to vector<256x128xbf16>
    %cst_15 = arith.constant dense<0.000000e+00> : vector<8x16x128xf32>
    %10 = tpu.matmul %7, %9, %cst_15 {dimension_numbers = #tpu.dot_dimension_numbers<[2], [0], [0, 1], [1], [0, 0, 0, 1, 1, 1], [], []>} : vector<8x16x256xbf16>, vector<256x128xbf16>, vector<8x16x128xf32> -> vector<8x16x128xf32>
    %c0_16 = arith.constant 0 : index
    %c0_17 = arith.constant 0 : index
    %c0_18 = arith.constant 0 : index
    %11 = vector.load %arg5[%c0_16, %c0_17, %c0_18] : memref<8x16x128xf32, #tpu.memory_space<vmem>>, vector<8x16x128xf32>
    %12 = arith.addf %11, %10 : vector<8x16x128xf32>
    %c0_19 = arith.constant 0 : index
    %c0_20 = arith.constant 0 : index
    %c0_21 = arith.constant 0 : index
    %13 = vector.load %arg5[%c0_19, %c0_20, %c0_21] : memref<8x16x128xf32, #tpu.memory_space<vmem>>, vector<8x16x128xf32>
    tpu.vector_store %arg5[%c0_19, %c0_20, %c0_21], %12 {strides = array<i32>} : memref<8x16x128xf32, #tpu.memory_space<vmem>>, vector<8x16x128xf32>,
    %c0_22 = arith.constant 0 : index
    %c2 = arith.constant 2 : index
    %c0_23 = arith.constant 0 : index
    %c0_24 = arith.constant 0 : index
    %14 = vector.load %arg1[%c0_22, %c2, %c0_23, %c0_24] : memref<1x14x16x256xbf16, #tpu.memory_space<vmem>>, vector<1x8x16x256xbf16>
    %15 = vector.shape_cast %14 : vector<1x8x16x256xbf16> to vector<8x16x256xbf16>
    %c2_25 = arith.constant 2 : index
    %c0_26 = arith.constant 0 : index
    %c0_27 = arith.constant 0 : index
    %16 = vector.load %arg2[%c2_25, %c0_26, %c0_27] : memref<7x256x128xbf16, #tpu.memory_space<vmem>>, vector<1x256x128xbf16>
    %17 = vector.shape_cast %16 : vector<1x256x128xbf16> to vector<256x128xbf16>
    %cst_28 = arith.constant dense<0.000000e+00> : vector<8x16x128xf32>
    %18 = tpu.matmul %15, %17, %cst_28 {dimension_numbers = #tpu.dot_dimension_numbers<[2], [0], [0, 1], [1], [0, 0, 0, 1, 1, 1], [], []>} : vector<8x16x256xbf16>, vector<256x128xbf16>, vector<8x16x128xf32> -> vector<8x16x128xf32>
    %c0_29 = arith.constant 0 : index
    %c0_30 = arith.constant 0 : index
    %c0_31 = arith.constant 0 : index
    %19 = vector.load %arg5[%c0_29, %c0_30, %c0_31] : memref<8x16x128xf32, #tpu.memory_space<vmem>>, vector<8x16x128xf32>
    %20 = arith.addf %19, %18 : vector<8x16x128xf32>
    %c0_32 = arith.constant 0 : index
    %c0_33 = arith.constant 0 : index
    %c0_34 = arith.constant 0 : index
    %21 = vector.load %arg5[%c0_32, %c0_33, %c0_34] : memref<8x16x128xf32, #tpu.memory_space<vmem>>, vector<8x16x128xf32>
    tpu.vector_store %arg5[%c0_32, %c0_33, %c0_34], %20 {strides = array<i32>} : memref<8x16x128xf32, #tpu.memory_space<vmem>>, vector<8x16x128xf32>,
    %c0_35 = arith.constant 0 : index
    %c3 = arith.constant 3 : index
    %c0_36 = arith.constant 0 : index
    %c0_37 = arith.constant 0 : index
    %22 = vector.load %arg1[%c0_35, %c3, %c0_36, %c0_37] : memref<1x14x16x256xbf16, #tpu.memory_space<vmem>>, vector<1x8x16x256xbf16>
    %23 = vector.shape_cast %22 : vector<1x8x16x256xbf16> to vector<8x16x256xbf16>
    %c3_38 = arith.constant 3 : index
    %c0_39 = arith.constant 0 : index
    %c0_40 = arith.constant 0 : index
    %24 = vector.load %arg2[%c3_38, %c0_39, %c0_40] : memref<7x256x128xbf16, #tpu.memory_space<vmem>>, vector<1x256x128xbf16>
    %25 = vector.shape_cast %24 : vector<1x256x128xbf16> to vector<256x128xbf16>
    %cst_41 = arith.constant dense<0.000000e+00> : vector<8x16x128xf32>
    %26 = tpu.matmul %23, %25, %cst_41 {dimension_numbers = #tpu.dot_dimension_numbers<[2], [0], [0, 1], [1], [0, 0, 0, 1, 1, 1], [], []>} : vector<8x16x256xbf16>, vector<256x128xbf16>, vector<8x16x128xf32> -> vector<8x16x128xf32>
    %c0_42 = arith.constant 0 : index
    %c0_43 = arith.constant 0 : index
    %c0_44 = arith.constant 0 : index
    %27 = vector.load %arg5[%c0_42, %c0_43, %c0_44] : memref<8x16x128xf32, #tpu.memory_space<vmem>>, vector<8x16x128xf32>
    %28 = arith.addf %27, %26 : vector<8x16x128xf32>
    %c0_45 = arith.constant 0 : index
    %c0_46 = arith.constant 0 : index
    %c0_47 = arith.constant 0 : index
    %29 = vector.load %arg5[%c0_45, %c0_46, %c0_47] : memref<8x16x128xf32, #tpu.memory_space<vmem>>, vector<8x16x128xf32>
    tpu.vector_store %arg5[%c0_45, %c0_46, %c0_47], %28 {strides = array<i32>} : memref<8x16x128xf32, #tpu.memory_space<vmem>>, vector<8x16x128xf32>,
    %c0_48 = arith.constant 0 : index
    %c4 = arith.constant 4 : index
    %c0_49 = arith.constant 0 : index
    %c0_50 = arith.constant 0 : index
    %30 = vector.load %arg1[%c0_48, %c4, %c0_49, %c0_50] : memref<1x14x16x256xbf16, #tpu.memory_space<vmem>>, vector<1x8x16x256xbf16>
    %31 = vector.shape_cast %30 : vector<1x8x16x256xbf16> to vector<8x16x256xbf16>
    %c4_51 = arith.constant 4 : index
    %c0_52 = arith.constant 0 : index
    %c0_53 = arith.constant 0 : index
    %32 = vector.load %arg2[%c4_51, %c0_52, %c0_53] : memref<7x256x128xbf16, #tpu.memory_space<vmem>>, vector<1x256x128xbf16>
    %33 = vector.shape_cast %32 : vector<1x256x128xbf16> to vector<256x128xbf16>
    %cst_54 = arith.constant dense<0.000000e+00> : vector<8x16x128xf32>
    %34 = tpu.matmul %31, %33, %cst_54 {dimension_numbers = #tpu.dot_dimension_numbers<[2], [0], [0, 1], [1], [0, 0, 0, 1, 1, 1], [], []>} : vector<8x16x256xbf16>, vector<256x128xbf16>, vector<8x16x128xf32> -> vector<8x16x128xf32>
    %c0_55 = arith.constant 0 : index
    %c0_56 = arith.constant 0 : index
    %c0_57 = arith.constant 0 : index
    %35 = vector.load %arg5[%c0_55, %c0_56, %c0_57] : memref<8x16x128xf32, #tpu.memory_space<vmem>>, vector<8x16x128xf32>
    %36 = arith.addf %35, %34 : vector<8x16x128xf32>
    %c0_58 = arith.constant 0 : index
    %c0_59 = arith.constant 0 : index
    %c0_60 = arith.constant 0 : index
    %37 = vector.load %arg5[%c0_58, %c0_59, %c0_60] : memref<8x16x128xf32, #tpu.memory_space<vmem>>, vector<8x16x128xf32>
    tpu.vector_store %arg5[%c0_58, %c0_59, %c0_60], %36 {strides = array<i32>} : memref<8x16x128xf32, #tpu.memory_space<vmem>>, vector<8x16x128xf32>,
    %c0_61 = arith.constant 0 : index
    %c5 = arith.constant 5 : index
    %c0_62 = arith.constant 0 : index
    %c0_63 = arith.constant 0 : index
    %38 = vector.load %arg1[%c0_61, %c5, %c0_62, %c0_63] : memref<1x14x16x256xbf16, #tpu.memory_space<vmem>>, vector<1x8x16x256xbf16>
    %39 = vector.shape_cast %38 : vector<1x8x16x256xbf16> to vector<8x16x256xbf16>
    %c5_64 = arith.constant 5 : index
    %c0_65 = arith.constant 0 : index
    %c0_66 = arith.constant 0 : index
    %40 = vector.load %arg2[%c5_64, %c0_65, %c0_66] : memref<7x256x128xbf16, #tpu.memory_space<vmem>>, vector<1x256x128xbf16>
    %41 = vector.shape_cast %40 : vector<1x256x128xbf16> to vector<256x128xbf16>
    %cst_67 = arith.constant dense<0.000000e+00> : vector<8x16x128xf32>
    %42 = tpu.matmul %39, %41, %cst_67 {dimension_numbers = #tpu.dot_dimension_numbers<[2], [0], [0, 1], [1], [0, 0, 0, 1, 1, 1], [], []>} : vector<8x16x256xbf16>, vector<256x128xbf16>, vector<8x16x128xf32> -> vector<8x16x128xf32>
    %c0_68 = arith.constant 0 : index
    %c0_69 = arith.constant 0 : index
    %c0_70 = arith.constant 0 : index
    %43 = vector.load %arg5[%c0_68, %c0_69, %c0_70] : memref<8x16x128xf32, #tpu.memory_space<vmem>>, vector<8x16x128xf32>
    %44 = arith.addf %43, %42 : vector<8x16x128xf32>
    %c0_71 = arith.constant 0 : index
    %c0_72 = arith.constant 0 : index
    %c0_73 = arith.constant 0 : index
    %45 = vector.load %arg5[%c0_71, %c0_72, %c0_73] : memref<8x16x128xf32, #tpu.memory_space<vmem>>, vector<8x16x128xf32>
    tpu.vector_store %arg5[%c0_71, %c0_72, %c0_73], %44 {strides = array<i32>} : memref<8x16x128xf32, #tpu.memory_space<vmem>>, vector<8x16x128xf32>,
    %c0_74 = arith.constant 0 : index
    %c6 = arith.constant 6 : index
    %c0_75 = arith.constant 0 : index
    %c0_76 = arith.constant 0 : index
    %46 = vector.load %arg1[%c0_74, %c6, %c0_75, %c0_76] : memref<1x14x16x256xbf16, #tpu.memory_space<vmem>>, vector<1x8x16x256xbf16>
    %47 = vector.shape_cast %46 : vector<1x8x16x256xbf16> to vector<8x16x256xbf16>
    %c6_77 = arith.constant 6 : index
    %c0_78 = arith.constant 0 : index
    %c0_79 = arith.constant 0 : index
    %48 = vector.load %arg2[%c6_77, %c0_78, %c0_79] : memref<7x256x128xbf16, #tpu.memory_space<vmem>>, vector<1x256x128xbf16>
    %49 = vector.shape_cast %48 : vector<1x256x128xbf16> to vector<256x128xbf16>
    %cst_80 = arith.constant dense<0.000000e+00> : vector<8x16x128xf32>
    %50 = tpu.matmul %47, %49, %cst_80 {dimension_numbers = #tpu.dot_dimension_numbers<[2], [0], [0, 1], [1], [0, 0, 0, 1, 1, 1], [], []>} : vector<8x16x256xbf16>, vector<256x128xbf16>, vector<8x16x128xf32> -> vector<8x16x128xf32>
    %c0_81 = arith.constant 0 : index
    %c0_82 = arith.constant 0 : index
    %c0_83 = arith.constant 0 : index
    %51 = vector.load %arg5[%c0_81, %c0_82, %c0_83] : memref<8x16x128xf32, #tpu.memory_space<vmem>>, vector<8x16x128xf32>
    %52 = arith.addf %51, %50 : vector<8x16x128xf32>
    %c0_84 = arith.constant 0 : index
    %c0_85 = arith.constant 0 : index
    %c0_86 = arith.constant 0 : index
    %53 = vector.load %arg5[%c0_84, %c0_85, %c0_86] : memref<8x16x128xf32, #tpu.memory_space<vmem>>, vector<8x16x128xf32>
    tpu.vector_store %arg5[%c0_84, %c0_85, %c0_86], %52 {strides = array<i32>} : memref<8x16x128xf32, #tpu.memory_space<vmem>>, vector<8x16x128xf32>,
    %c0_87 = arith.constant 0 : index
    %c0_88 = arith.constant 0 : index
    %c0_89 = arith.constant 0 : index
    %54 = vector.load %arg5[%c0_87, %c0_88, %c0_89] : memref<8x16x128xf32, #tpu.memory_space<vmem>>, vector<8x16x128xf32>
    %c0_90 = arith.constant 0 : index
    %c0_91 = arith.constant 0 : index
    %c0_92 = arith.constant 0 : index
    %55 = vector.load %arg3[%c0_90, %c0_91, %c0_92] : memref<1x1x128xf32, #tpu.memory_space<vmem>>, vector<1x1x128xf32>
    %56 = vector.broadcast %55 : vector<1x1x128xf32> to vector<8x16x128xf32>
    %57 = arith.addf %54, %56 : vector<8x16x128xf32>
    %c0_93 = arith.constant 0 : index
    %c0_94 = arith.constant 0 : index
    %c0_95 = arith.constant 0 : index
    %c0_96 = arith.constant 0 : index
    %58 = vector.load %arg4[%c0_93, %c0_94, %c0_95, %c0_96] : memref<1x8x16x128xf32, #tpu.memory_space<vmem>>, vector<1x8x16x128xf32>
    %59 = vector.shape_cast %58 : vector<1x8x16x128xf32> to vector<8x16x128xf32>
    %60 = vector.shape_cast %57 : vector<8x16x128xf32> to vector<1x8x16x128xf32>
    tpu.vector_store %arg4[%c0_93, %c0_94, %c0_95, %c0_96], %60 {strides = array<i32>} : memref<1x8x16x128xf32, #tpu.memory_space<vmem>>, vector<1x8x16x128xf32>,
    return
  }
  func.func @transform_0(%arg0: i32) -> (i32, i32, i32, i32) {
    %c0_i32 = arith.constant 0 : i32
    %c0_i32_0 = arith.constant 0 : i32
    %c0_i32_1 = arith.constant 0 : i32
    %c0_i32_2 = arith.constant 0 : i32
    return %arg0, %c0_i32, %c0_i32_0, %c0_i32_1 : i32, i32, i32, i32
  }
  func.func @transform_1(%arg0: i32) -> (i32, i32, i32) {
    %c0_i32 = arith.constant 0 : i32
    %c0_i32_0 = arith.constant 0 : i32
    %c0_i32_1 = arith.constant 0 : i32
    %c0_i32_2 = arith.constant 0 : i32
    return %c0_i32, %c0_i32_0, %c0_i32_1 : i32, i32, i32
  }
  func.func @transform_2(%arg0: i32) -> (i32, i32, i32) {
    %c0_i32 = arith.constant 0 : i32
    %c0_i32_0 = arith.constant 0 : i32
    %c0_i32_1 = arith.constant 0 : i32
    %c0_i32_2 = arith.constant 0 : i32
    return %c0_i32, %c0_i32_0, %c0_i32_1 : i32, i32, i32
  }
  func.func @transform_3(%arg0: i32) -> (i32, i32, i32, i32) {
    %c0_i32 = arith.constant 0 : i32
    %c0_i32_0 = arith.constant 0 : i32
    %c0_i32_1 = arith.constant 0 : i32
    %c0_i32_2 = arith.constant 0 : i32
    return %arg0, %c0_i32, %c0_i32_0, %c0_i32_1 : i32, i32, i32, i32
  }
}

</mosaic_0001>

<llo_original>
// kernel: tpu_custom_call.1
$region0: #{tpu_custom_call.1}
  #allocation0 [shape = 'u32[]', space=smem, size = 0x4, offset = 0x4, fixed_abs, tag = 'smem constant byte address 0x4 - core index']
  #allocation1 [shape = 'u32[144,128]{1,0:T(1,128)}', space=vmem, size = 0x12000, scoped, tag = 'internal scratch']
  #allocation2 [shape = 'f32[8,16,128]{2,1,0:T(8,128)}', space=vmem, size = 0x10000, scoped, tag = 'scratch operand']
  %s0 = inlined_call_operand.hbm [shape: bf16[4,14,16,256], index: 0, kind: input, shape index: {}]
  %s1 = inlined_call_operand.hbm [shape: bf16[7,256,128], index: 1, kind: input, shape index: {}]
  %s2 = inlined_call_operand.vmem [shape: f32[1,1,128], index: 2, kind: input, shape index: {}]
  %s3 = inlined_call_operand.hbm [shape: f32[4,8,16,128], index: 3, kind: output, shape index: {}]
  %s4 = sld [smem:[#allocation0]]
  $region53: #{tpu_custom_call.1} parent=0
    _
  %s6 = ssub.s32 1, %s4
  %s7 = scalar_select 0, %s6, %s4
  $region1: #{tpu_custom_call.1} parent=0
    #allocation3 [shape = 'u8[229376]{0}', space=vmem, size = 0x38000, scoped, tag = 'input window, operand 0']
    #allocation4 [shape = 's32[2]{0}', space=sflag, size = 0x8, scoped, tag = 'scoped memory for tpu_custom_call.1']
    #allocation5 [shape = 's32[2]{0}', space=sflag, size = 0x8, scoped, tag = 'scoped memory for tpu_custom_call.1']
    #allocation6 [shape = 'u8[458752]{0}', space=vmem, size = 0x70000, scoped, tag = 'input window, operand 1, single buffered']
    #allocation7 [shape = 's32[1]{0}', space=sflag, size = 0x4, scoped, tag = 'scoped memory for tpu_custom_call.1']
    #allocation8 [shape = 'u8[131072]{0}', space=vmem, size = 0x20000, scoped, tag = 'output window, operand 0']
    %8 = vsyncpa [#allocation4], 0
    %s9 = scalar_lea.sflag [#allocation4], 1
    %10 = vsyncpa %s9, 0
    %11 = vsyncpa [#allocation7], 0
    %12 = vsyncpa [#allocation5], 0
    %s13 = scalar_lea.sflag [#allocation5], 1
    %14 = vsyncpa %s13, 0
    loop: start=0, step=1, limit=6
    $region2: #{tpu_custom_call.1} parent=1 // loop_pre_header
      _
    $region3: #{tpu_custom_call.1} parent=1 // loop_header
      %s16 = sphi 0, %s20
      %p17 = scmp.ge.s32.totalorder %s16, 6
      %s26 = sphi 0, %s28
      %s29 = sphi 0, %s26
      %s30 = sphi 0, %s29
      %s46 = sphi 0, %s30
      %s50 = sphi 0, %s50
      %s52 = sphi 0, %s50
      %s53 = sphi 0, %s52
      %s67 = sphi 0, %s53
      %s71 = sphi 0, %s71
      %s73 = sphi 0, %s71
      %s74 = sphi 0, %s73
      %s88 = sphi 0, %s74
      %s94 = sphi 0, %s96
      %s97 = sphi 0, %s94
      %s98 = sphi 0, %s97
      %s114 = sphi 0, %s98
    $region4: #{tpu_custom_call.1} parent=1 // loop_header_branch
      %19 = sbr.rel (%p17) target = $region8
    $region5: #{tpu_custom_call.1} parent=1 // loop_body
      %s21 = ssub.s32 %s16, 1
      %s22 = ssub.s32 %s16, 2
      %s23 = sadd.s32 %s16, 1
      %s24 = ssub.s32 %s16, %s23
      %p25 = scmp.eq.s32.totalorder %s24, 0
      %s27 = sadd.s32 %s26, 1
      %s28 = scalar_select %p25, %s26, %s27
      %p31 = pneg %p25
      %p32 = scmp.eq.s32.totalorder %s16, 3
      %p33 = por %p31, %p32
      %p34 = scmp.ne.s32.totalorder %s26, %s29
      %p35 = scmp.eq.s32.totalorder %s16, 0
      %p36 = por %p34, %p35
      %p37 = scmp.ne.s32.totalorder %s26, %s29
      %p38 = scmp.eq.s32.totalorder %s21, 3
      %p39 = por %p37, %p38
      %p40 = scmp.ne.s32.totalorder %s29, %s30
      %p41 = scmp.eq.s32.totalorder %s21, 0
      %p42 = por %p40, %p41
      %p43 = scmp.ne.s32.totalorder %s29, %s30
      %p44 = scmp.eq.s32.totalorder %s22, 3
      %p45 = por %p43, %p44
      %p47 = scmp.ne.s32.totalorder %s30, %s46
      %p48 = scmp.eq.s32.totalorder %s22, 0
      %p49 = por %p47, %p48
      %s51 = sadd.s32 %s50, 1
      %p54 = scmp.eq.s32.totalorder %s16, 3
      %p55 = scmp.ne.s32.totalorder %s50, %s52
      %p56 = scmp.eq.s32.totalorder %s16, 0
      %p57 = por %p55, %p56
      %p58 = scmp.ne.s32.totalorder %s50, %s52
      %p59 = scmp.eq.s32.totalorder %s21, 3
      %p60 = por %p58, %p59
      %p61 = scmp.ne.s32.totalorder %s52, %s53
      %p62 = scmp.eq.s32.totalorder %s21, 0
      %p63 = por %p61, %p62
      %p64 = scmp.ne.s32.totalorder %s52, %s53
      %p65 = scmp.eq.s32.totalorder %s22, 3
      %p66 = por %p64, %p65
      %p68 = scmp.ne.s32.totalorder %s53, %s67
      %p69 = scmp.eq.s32.totalorder %s22, 0
      %p70 = por %p68, %p69
      %s72 = sadd.s32 %s71, 1
      %p75 = scmp.eq.s32.totalorder %s16, 3
      %p76 = scmp.ne.s32.totalorder %s71, %s73
      %p77 = scmp.eq.s32.totalorder %s16, 0
      %p78 = por %p76, %p77
      %p79 = scmp.ne.s32.totalorder %s71, %s73
      %p80 = scmp.eq.s32.totalorder %s21, 3
      %p81 = por %p79, %p80
      %p82 = scmp.ne.s32.totalorder %s73, %s74
      %p83 = scmp.eq.s32.totalorder %s21, 0
      %p84 = por %p82, %p83
      %p85 = scmp.ne.s32.totalorder %s73, %s74
      %p86 = scmp.eq.s32.totalorder %s22, 3
      %p87 = por %p85, %p86
      %p89 = scmp.ne.s32.totalorder %s74, %s88
      %p90 = scmp.eq.s32.totalorder %s22, 0
      %p91 = por %p89, %p90
      %s92 = ssub.s32 %s16, %s23
      %p93 = scmp.eq.s32.totalorder %s92, 0
      %s95 = sadd.s32 %s94, 1
      %s96 = scalar_select %p93, %s94, %s95
      %p99 = pneg %p93
      %p100 = scmp.eq.s32.totalorder %s16, 3
      %p101 = por %p99, %p100
      %p102 = scmp.ne.s32.totalorder %s94, %s97
      %p103 = scmp.eq.s32.totalorder %s16, 0
      %p104 = por %p102, %p103
      %p105 = scmp.ne.s32.totalorder %s94, %s97
      %p106 = scmp.eq.s32.totalorder %s21, 3
      %p107 = por %p105, %p106
      %p108 = scmp.ne.s32.totalorder %s97, %s98
      %p109 = scmp.eq.s32.totalorder %s21, 0
      %p110 = por %p108, %p109
      %p111 = scmp.ne.s32.totalorder %s97, %s98
      %p112 = scmp.eq.s32.totalorder %s22, 3
      %p113 = por %p111, %p112
      %p115 = scmp.ne.s32.totalorder %s98, %s114
      %p116 = scmp.eq.s32.totalorder %s22, 0
      %p117 = por %p115, %p116
      %p118 = scmp.le.s32.totalorder 1, %s16
      %p119 = scmp.lt.s32.totalorder %s16, 5
      %p120 = pnand %p118, %p119
      %p121 = pneg %p120
      // Predicated region
      $region9: #{tpu_custom_call.1} parent=5 // pred_check
        _
      $region10: #{tpu_custom_call.1} parent=5 // pred_check_branch
        %123 = sbr.rel (%p120) target = $region12
      $region11: #{tpu_custom_call.1} parent=5 // pred_region
        %s124 = ssub.s32 %s16, 1
        // Predicated region
        $region13: #{tpu_custom_call.1} parent=11 // pred_check
          %p125 = pneg %p63
        $region14: #{tpu_custom_call.1} parent=11 // pred_check_branch
          %127 = sbr.rel (%p125) target = $region16
        $region15: #{tpu_custom_call.1} parent=11 // pred_region
          %s129 = ssub.s32 14336, 14336
          %130 = vsyncadd [#allocation7], %s129
          %s131 = sshll.u32 [#allocation6], 4
          %s132 = int_to_ptr.vmem [resolvable:$true] %s131
          %137 = dma.hbm_to_vmem [thread:$0]  %s1, 14336, %s132, [#allocation7], 64, 64, 4
        $region16: #{tpu_custom_call.1} parent=11 // pred_fallthru
          _
        // Predicated region
        $region17: #{tpu_custom_call.1} parent=11 // pred_check
          %p138 = pneg %p84
        $region18: #{tpu_custom_call.1} parent=11 // pred_check_branch
          %140 = sbr.rel (%p138) target = $region20
        $region19: #{tpu_custom_call.1} parent=11 // pred_region
          _
        $region20: #{tpu_custom_call.1} parent=11 // pred_fallthru
          _
      $region12: #{tpu_custom_call.1} parent=5 // pred_fallthru
        _
      %p141 = scmp.lt.s32.totalorder %s16, 4
      // Predicated region
      $region21: #{tpu_custom_call.1} parent=5 // pred_check
        %p142 = pneg %p141
      $region22: #{tpu_custom_call.1} parent=5 // pred_check_branch
        %144 = sbr.rel (%p142) target = $region24
      $region23: #{tpu_custom_call.1} parent=5 // pred_region
        // Predicated region
        $region25: #{tpu_custom_call.1} parent=23 // pred_check
          %p145 = pneg %p36
        $region26: #{tpu_custom_call.1} parent=23 // pred_check_branch
          %147 = sbr.rel (%p145) target = $region28
        $region27: #{tpu_custom_call.1} parent=23 // pred_region
          %s148 = sand.u32 %s26, 1
          %s149 = scalar_lea.sflag [#allocation4], %s148
          %s150 = sand.u32 %s26, 1
          %s151 = smul.addr %s150, 224
          %s152 = scalar_lea.vmem [#allocation3], %s151
          %s154 = ssub.s32 3584, 3584
          %155 = vsyncadd %s149, %s154
          %s156 = smul.addr %s16, 56
          %s157 = smul.addr %s156, 64
          %s158 = scalar_lea.hbm %s0, %s157
          %s159 = sshll.u32 %s152, 4
          %s160 = int_to_ptr.vmem [resolvable:$true] %s159
          %165 = dma.hbm_to_vmem [thread:$0]  %s158, 3584, %s160, %s149, 128, 128, 8
        $region28: #{tpu_custom_call.1} parent=23 // pred_fallthru
          _
      $region24: #{tpu_custom_call.1} parent=5 // pred_fallthru
        _
      %p166 = scmp.le.s32.totalorder 1, %s16
      %p167 = scmp.lt.s32.totalorder %s16, 5
      %p168 = pnand %p166, %p167
      %p169 = pneg %p168
      // Predicated region
      $region29: #{tpu_custom_call.1} parent=5 // pred_check
        _
      $region30: #{tpu_custom_call.1} parent=5 // pred_check_branch
        %171 = sbr.rel (%p168) target = $region32
      $region31: #{tpu_custom_call.1} parent=5 // pred_region
        %s172 = ssub.s32 %s16, 1
        %s173 = sand.u32 %s29, 1
        %s174 = scalar_lea.sflag [#allocation4], %s173
        %s175 = sand.u32 %s29, 1
        %s176 = smul.addr %s175, 224
        %s177 = scalar_lea.vmem [#allocation3], %s176
        // Predicated region
        $region33: #{tpu_custom_call.1} parent=31 // pred_check
          %p178 = pneg %p42
        $region34: #{tpu_custom_call.1} parent=31 // pred_check_branch
          %180 = sbr.rel (%p178) target = $region36
        $region35: #{tpu_custom_call.1} parent=31 // pred_region
          %181 = dma.done %s174, 3584
        $region36: #{tpu_custom_call.1} parent=31 // pred_fallthru
          _
        // Predicated region
        $region37: #{tpu_custom_call.1} parent=31 // pred_check
          %p182 = pneg %p63
        $region38: #{tpu_custom_call.1} parent=31 // pred_check_branch
          %184 = sbr.rel (%p182) target = $region40
        $region39: #{tpu_custom_call.1} parent=31 // pred_region
          %185 = dma.done [#allocation7], 14336
        $region40: #{tpu_custom_call.1} parent=31 // pred_fallthru
          _
        %s186 = sand.u32 %s29, 1
        %s187 = scalar_lea.sflag [#allocation4], %s186
        %s188 = sand.u32 %s29, 1
        %s189 = smul.addr %s188, 224
        %s190 = scalar_lea.vmem [#allocation3], %s189
        %p191 = pneg %p42
        %p192 = pneg %p39
        %p193 = pneg %p63
        %p194 = pneg %p60
        %p195 = pneg %p84
        %p196 = pneg %p81
        %p197 = pneg %p110
        %p198 = pneg %p107
        %s199 = sand.u32 %s97, 1
        %s200 = scalar_lea.sflag [#allocation5], %s199
        %s201 = sand.u32 %s97, 1
        %s202 = smul.addr %s201, 128
        %s203 = scalar_lea.vmem [#allocation8], %s202
        %v205 = vld [vmem:[%s177] sm:$0xff]
        %v206 = vld [vmem:[%s177 + $0x8] sm:$0xff]
        %v207 = vld [vmem:[%s177 + $0x10] sm:$0xff]
        %v208 = vld [vmem:[%s177 + $0x18] sm:$0xff]
        %v209 = vld [vmem:[%s177 + $0x20] sm:$0xff]
        %v210 = vld [vmem:[%s177 + $0x28] sm:$0xff]
        %v211 = vld [vmem:[%s177 + $0x30] sm:$0xff]
        %v212 = vld [vmem:[%s177 + $0x38] sm:$0xff]
        %v213 = vld [vmem:[%s177 + $0x40] sm:$0xff]
        %v214 = vld [vmem:[%s177 + $0x48] sm:$0xff]
        %v215 = vld [vmem:[%s177 + $0x50] sm:$0xff]
        %v216 = vld [vmem:[%s177 + $0x58] sm:$0xff]
        %v217 = vld [vmem:[%s177 + $0x60] sm:$0xff]
        %v218 = vld [vmem:[%s177 + $0x68] sm:$0xff]
        %v219 = vld [vmem:[%s177 + $0x70] sm:$0xff]
        %v220 = vld [vmem:[%s177 + $0x78] sm:$0xff]
        %v221 = vld [vmem:[#allocation6] sm:$0xf]
        %v222 = vld [vmem:[#allocation6 + $0x4] sm:$0xf]
        %v223 = vld [vmem:[#allocation6 + $0x8] sm:$0xf]
        %v224 = vld [vmem:[#allocation6 + $0xc] sm:$0xf]
        %v225 = vld [vmem:[#allocation6 + $0x10] sm:$0xf]
        %v226 = vld [vmem:[#allocation6 + $0x14] sm:$0xf]
        %v227 = vld [vmem:[#allocation6 + $0x18] sm:$0xf]
        %v228 = vld [vmem:[#allocation6 + $0x1c] sm:$0xf]
        %v229 = vld [vmem:[#allocation6 + $0x20] sm:$0xf]
        %v230 = vld [vmem:[#allocation6 + $0x24] sm:$0xf]
        %v231 = vld [vmem:[#allocation6 + $0x28] sm:$0xf]
        %v232 = vld [vmem:[#allocation6 + $0x2c] sm:$0xf]
        %v233 = vld [vmem:[#allocation6 + $0x30] sm:$0xf]
        %v234 = vld [vmem:[#allocation6 + $0x34] sm:$0xf]
        %v235 = vld [vmem:[#allocation6 + $0x38] sm:$0xf]
        %v236 = vld [vmem:[#allocation6 + $0x3c] sm:$0xf]
        %v237 = vld [vmem:[#allocation6 + $0x40] sm:$0xf]
        %v238 = vld [vmem:[#allocation6 + $0x44] sm:$0xf]
        %v239 = vld [vmem:[#allocation6 + $0x48] sm:$0xf]
        %v240 = vld [vmem:[#allocation6 + $0x4c] sm:$0xf]
        %v241 = vld [vmem:[#allocation6 + $0x50] sm:$0xf]
        %v242 = vld [vmem:[#allocation6 + $0x54] sm:$0xf]
        %v243 = vld [vmem:[#allocation6 + $0x58] sm:$0xf]
        %v244 = vld [vmem:[#allocation6 + $0x5c] sm:$0xf]
        %v245 = vld [vmem:[#allocation6 + $0x60] sm:$0xf]
        %v246 = vld [vmem:[#allocation6 + $0x64] sm:$0xf]
        %v247 = vld [vmem:[#allocation6 + $0x68] sm:$0xf]
        %v248 = vld [vmem:[#allocation6 + $0x6c] sm:$0xf]
        %v249 = vld [vmem:[#allocation6 + $0x70] sm:$0xf]
        %v250 = vld [vmem:[#allocation6 + $0x74] sm:$0xf]
        %v251 = vld [vmem:[#allocation6 + $0x78] sm:$0xf]
        %v252 = vld [vmem:[#allocation6 + $0x7c] sm:$0xf]
        %v269 = vunpack.c.l.b16 %v205
        %v270 = vunpack.c.h.b16 %v205
        %v271 = vunpack.c.l.b16 %v206
        %v272 = vunpack.c.h.b16 %v206
        %v273 = vunpack.c.l.b16 %v207
        %v274 = vunpack.c.h.b16 %v207
        %v275 = vunpack.c.l.b16 %v208
        %v276 = vunpack.c.h.b16 %v208
        %v277 = vunpack.c.l.b16 %v209
        %v278 = vunpack.c.h.b16 %v209
        %v279 = vunpack.c.l.b16 %v210
        %v280 = vunpack.c.h.b16 %v210
        %v281 = vunpack.c.l.b16 %v211
        %v282 = vunpack.c.h.b16 %v211
        %v283 = vunpack.c.l.b16 %v212
        %v284 = vunpack.c.h.b16 %v212
        %v285 = vunpack.c.l.b16 %v213
        %v286 = vunpack.c.h.b16 %v213
        %v287 = vunpack.c.l.b16 %v214
        %v288 = vunpack.c.h.b16 %v214
        %v289 = vunpack.c.l.b16 %v215
        %v290 = vunpack.c.h.b16 %v215
        %v291 = vunpack.c.l.b16 %v216
        %v292 = vunpack.c.h.b16 %v216
        %v293 = vunpack.c.l.b16 %v217
        %v294 = vunpack.c.h.b16 %v217
        %v295 = vunpack.c.l.b16 %v218
        %v296 = vunpack.c.h.b16 %v218
        %v297 = vunpack.c.l.b16 %v219
        %v298 = vunpack.c.h.b16 %v219
        %v299 = vunpack.c.l.b16 %v220
        %v300 = vunpack.c.h.b16 %v220
        %v301 = vpack.c.b16 %v271, %v269
        %v302 = vpack.c.b16 %v272, %v270
        %v303 = vpack.c.b16 %v275, %v273
        %v304 = vpack.c.b16 %v276, %v274
        %v305 = vpack.c.b16 %v279, %v277
        %v306 = vpack.c.b16 %v280, %v278
        %v307 = vpack.c.b16 %v283, %v281
        %v308 = vpack.c.b16 %v284, %v282
        %v309 = vpack.c.b16 %v287, %v285
        %v310 = vpack.c.b16 %v288, %v286
        %v311 = vpack.c.b16 %v291, %v289
        %v312 = vpack.c.b16 %v292, %v290
        %v313 = vpack.c.b16 %v295, %v293
        %v314 = vpack.c.b16 %v296, %v294
        %v315 = vpack.c.b16 %v299, %v297
        %v316 = vpack.c.b16 %v300, %v298
        %v365 = vunpack.c.l.b16 %v221
        %v366 = vunpack.c.l.b16 %v222
        %v367 = vunpack.c.l.b16 %v223
        %v368 = vunpack.c.l.b16 %v224
        %v369 = vunpack.c.l.b16 %v225
        %v370 = vunpack.c.l.b16 %v226
        %v371 = vunpack.c.l.b16 %v227
        %v372 = vunpack.c.l.b16 %v228
        %v373 = vunpack.c.l.b16 %v229
        %v374 = vunpack.c.l.b16 %v230
        %v375 = vunpack.c.l.b16 %v231
        %v376 = vunpack.c.l.b16 %v232
        %v377 = vunpack.c.l.b16 %v233
        %v378 = vunpack.c.l.b16 %v234
        %v379 = vunpack.c.l.b16 %v235
        %v380 = vunpack.c.l.b16 %v236
        %v381 = vunpack.c.l.b16 %v237
        %v382 = vunpack.c.l.b16 %v238
        %v383 = vunpack.c.l.b16 %v239
        %v384 = vunpack.c.l.b16 %v240
        %v385 = vunpack.c.l.b16 %v241
        %v386 = vunpack.c.l.b16 %v242
        %v387 = vunpack.c.l.b16 %v243
        %v388 = vunpack.c.l.b16 %v244
        %v389 = vunpack.c.l.b16 %v245
        %v390 = vunpack.c.l.b16 %v246
        %v391 = vunpack.c.l.b16 %v247
        %v392 = vunpack.c.l.b16 %v248
        %v393 = vunpack.c.l.b16 %v249
        %v394 = vunpack.c.l.b16 %v250
        %v395 = vunpack.c.l.b16 %v251
        %v396 = vunpack.c.l.b16 %v252
        %v397 = vpack.c.b16 %v366, %v365
        %v398 = vpack.c.b16 %v368, %v367
        %v399 = vpack.c.b16 %v370, %v369
        %v400 = vpack.c.b16 %v372, %v371
        %v401 = vpack.c.b16 %v374, %v373
        %v402 = vpack.c.b16 %v376, %v375
        %v403 = vpack.c.b16 %v378, %v377
        %v404 = vpack.c.b16 %v380, %v379
        %v405 = vpack.c.b16 %v382, %v381
        %v406 = vpack.c.b16 %v384, %v383
        %v407 = vpack.c.b16 %v386, %v385
        %v408 = vpack.c.b16 %v388, %v387
        %v409 = vpack.c.b16 %v390, %v389
        %v410 = vpack.c.b16 %v392, %v391
        %v411 = vpack.c.b16 %v394, %v393
        %v412 = vpack.c.b16 %v396, %v395
        %429 = vmatprep.subr.bf16.mxu0 0
        %430 = vmatpush1.bf16.msra.mxu0 %v397
        %431 = vmatprep.subr.bf16.mxu0 0
        %432 = vmatpush1.bf16.msra.mxu0 %v398
        %433 = vmatprep.subr.bf16.mxu0 0
        %434 = vmatpush1.bf16.msra.mxu0 %v399
        %435 = vmatprep.subr.bf16.mxu0 0
        %436 = vmatpush1.bf16.msra.mxu0 %v400
        %437 = vmatprep.subr.bf16.mxu0 0
        %438 = vmatpush1.bf16.msra.mxu0 %v401
        %439 = vmatprep.subr.bf16.mxu0 0
        %440 = vmatpush1.bf16.msra.mxu0 %v402
        %441 = vmatprep.subr.bf16.mxu0 0
        %442 = vmatpush1.bf16.msra.mxu0 %v403
        %443 = vmatprep.subr.bf16.mxu0 0
        %444 = vmatpush1.bf16.msra.mxu0 %v404
        %445 = vmatprep.subr.bf16.mxu0 0
        %446 = vmatpush1.bf16.msra.mxu0 %v405
        %447 = vmatprep.subr.bf16.mxu0 0
        %448 = vmatpush1.bf16.msra.mxu0 %v406
        %449 = vmatprep.subr.bf16.mxu0 0
        %450 = vmatpush1.bf16.msra.mxu0 %v407
        %451 = vmatprep.subr.bf16.mxu0 0
        %452 = vmatpush1.bf16.msra.mxu0 %v408
        %453 = vmatprep.subr.bf16.mxu0 0
        %454 = vmatpush1.bf16.msra.mxu0 %v409
        %455 = vmatprep.subr.bf16.mxu0 0
        %456 = vmatpush1.bf16.msra.mxu0 %v410
        %457 = vmatprep.subr.bf16.mxu0 0
        %458 = vmatpush1.bf16.msra.mxu0 %v411
        %459 = vmatprep.subr.bf16.mxu0 0
        %460 = vmatpush1.bf16.msra.mxu0 %v412
        %461 = vmatprep.mubr.bf16.mxu0 %v302
        %462 = vmatmul.mubr.bf16.gmra.mrb[0].mxu0 %v301
        %v463 = vpop.f32.mrb[0].mxu0
        %v464 = vadd.f32 0.0, %v463
        %v465 = vpop.f32.mrb[0].mxu0
        %v466 = vpop.f32.mrb[0].mxu0
        %v467 = vadd.f32 0.0, %v466
        %v468 = vpop.f32.mrb[0].mxu0
        %469 = vmatprep.mubr.bf16.mxu0 %v304
        %470 = vmatmul.mubr.bf16.gmra.mrb[0].mxu0 %v303
        %v471 = vpop.f32.mrb[0].mxu0
        %v472 = vadd.f32 0.0, %v471
        %v473 = vpop.f32.mrb[0].mxu0
        %v474 = vpop.f32.mrb[0].mxu0
        %v475 = vadd.f32 0.0, %v474
        %v476 = vpop.f32.mrb[0].mxu0
        %477 = vmatprep.mubr.bf16.mxu0 %v306
        %478 = vmatmul.mubr.bf16.gmra.mrb[0].mxu0 %v305
        %v479 = vpop.f32.mrb[0].mxu0
        %v480 = vadd.f32 0.0, %v479
        %v481 = vpop.f32.mrb[0].mxu0
        %v482 = vpop.f32.mrb[0].mxu0
        %v483 = vadd.f32 0.0, %v482
        %v484 = vpop.f32.mrb[0].mxu0
        %485 = vmatprep.mubr.bf16.mxu0 %v308
        %486 = vmatmul.mubr.bf16.gmra.mrb[0].mxu0 %v307
        %v487 = vpop.f32.mrb[0].mxu0
        %v488 = vadd.f32 0.0, %v487
        %v489 = vpop.f32.mrb[0].mxu0
        %v490 = vpop.f32.mrb[0].mxu0
        %v491 = vadd.f32 0.0, %v490
        %v492 = vpop.f32.mrb[0].mxu0
        %493 = vmatprep.mubr.bf16.mxu0 %v310
        %494 = vmatmul.mubr.bf16.gmra.mrb[0].mxu0 %v309
        %v495 = vpop.f32.mrb[0].mxu0
        %v496 = vadd.f32 0.0, %v495
        %v497 = vpop.f32.mrb[0].mxu0
        %v498 = vpop.f32.mrb[0].mxu0
        %v499 = vadd.f32 0.0, %v498
        %v500 = vpop.f32.mrb[0].mxu0
        %501 = vmatprep.mubr.bf16.mxu0 %v312
        %502 = vmatmul.mubr.bf16.gmra.mrb[0].mxu0 %v311
        %v503 = vpop.f32.mrb[0].mxu0
        %v504 = vadd.f32 0.0, %v503
        %v505 = vpop.f32.mrb[0].mxu0
        %v506 = vpop.f32.mrb[0].mxu0
        %v507 = vadd.f32 0.0, %v506
        %v508 = vpop.f32.mrb[0].mxu0
        %509 = vmatprep.mubr.bf16.mxu0 %v314
        %510 = vmatmul.mubr.bf16.gmra.mrb[0].mxu0 %v313
        %v511 = vpop.f32.mrb[0].mxu0
        %v512 = vadd.f32 0.0, %v511
        %v513 = vpop.f32.mrb[0].mxu0
        %v514 = vpop.f32.mrb[0].mxu0
        %v515 = vadd.f32 0.0, %v514
        %v516 = vpop.f32.mrb[0].mxu0
        %517 = vmatprep.mubr.bf16.mxu0 %v316
        %518 = vmatmul.mubr.bf16.gmra.mrb[0].mxu0 %v315
        %v519 = vpop.f32.mrb[0].mxu0
        %v520 = vadd.f32 0.0, %v519
        %v521 = vpop.f32.mrb[0].mxu0
        %v522 = vpop.f32.mrb[0].mxu0
        %v523 = vadd.f32 0.0, %v522
        %v524 = vpop.f32.mrb[0].mxu0
        %525 = vdwg.mxu0
        %526 = vst [vmem:[#allocation2] sm:$0xff] %v464
        %527 = vst [vmem:[#allocation2 + $0x8] sm:$0xff] %v467
        %528 = vst [vmem:[#allocation2 + $0x10] sm:$0xff] %v472
        %529 = vst [vmem:[#allocation2 + $0x18] sm:$0xff] %v475
        %530 = vst [vmem:[#allocation2 + $0x20] sm:$0xff] %v480
        %531 = vst [vmem:[#allocation2 + $0x28] sm:$0xff] %v483
        %532 = vst [vmem:[#allocation2 + $0x30] sm:$0xff] %v488
        %533 = vst [vmem:[#allocation2 + $0x38] sm:$0xff] %v491
        %534 = vst [vmem:[#allocation2 + $0x40] sm:$0xff] %v496
        %535 = vst [vmem:[#allocation2 + $0x48] sm:$0xff] %v499
        %536 = vst [vmem:[#allocation2 + $0x50] sm:$0xff] %v504
        %537 = vst [vmem:[#allocation2 + $0x58] sm:$0xff] %v507
        %538 = vst [vmem:[#allocation2 + $0x60] sm:$0xff] %v512
        %539 = vst [vmem:[#allocation2 + $0x68] sm:$0xff] %v515
        %540 = vst [vmem:[#allocation2 + $0x70] sm:$0xff] %v520
        %541 = vst [vmem:[#allocation2 + $0x78] sm:$0xff] %v523
        %s542 = scalar_lea.vmem %s177, 16 [#allocation3]
        %v543 = vld [vmem:[%s542] sm:$0xff]
        %v544 = vld [vmem:[%s542 + $0x8] sm:$0xff]
        %v545 = vld [vmem:[%s542 + $0x10] sm:$0xff]
        %v546 = vld [vmem:[%s542 + $0x18] sm:$0xff]
        %v547 = vld [vmem:[%s542 + $0x20] sm:$0xff]
        %v548 = vld [vmem:[%s542 + $0x28] sm:$0xff]
        %v549 = vld [vmem:[%s542 + $0x30] sm:$0xff]
        %v550 = vld [vmem:[%s542 + $0x38] sm:$0xff]
        %v551 = vld [vmem:[%s542 + $0x40] sm:$0xff]
        %v552 = vld [vmem:[%s542 + $0x48] sm:$0xff]
        %v553 = vld [vmem:[%s542 + $0x50] sm:$0xff]
        %v554 = vld [vmem:[%s542 + $0x58] sm:$0xff]
        %v555 = vld [vmem:[%s542 + $0x60] sm:$0xff]
        %v556 = vld [vmem:[%s542 + $0x68] sm:$0xff]
        %v557 = vld [vmem:[%s542 + $0x70] sm:$0xff]
        %v558 = vld [vmem:[%s542 + $0x78] sm:$0xff]
        %s559 = scalar_lea.vmem [#allocation6], 128
        %v560 = vld [vmem:[%s559] sm:$0xf]
        %v561 = vld [vmem:[%s559 + $0x4] sm:$0xf]
        %v562 = vld [vmem:[%s559 + $0x8] sm:$0xf]
        %v563 = vld [vmem:[%s559 + $0xc] sm:$0xf]
        %v564 = vld [vmem:[%s559 + $0x10] sm:$0xf]
        %v565 = vld [vmem:[%s559 + $0x14] sm:$0xf]
        %v566 = vld [vmem:[%s559 + $0x18] sm:$0xf]
        %v567 = vld [vmem:[%s559 + $0x1c] sm:$0xf]
        %v568 = vld [vmem:[%s559 + $0x20] sm:$0xf]
        %v569 = vld [vmem:[%s559 + $0x24] sm:$0xf]
        %v570 = vld [vmem:[%s559 + $0x28] sm:$0xf]
        %v571 = vld [vmem:[%s559 + $0x2c] sm:$0xf]
        %v572 = vld [vmem:[%s559 + $0x30] sm:$0xf]
        %v573 = vld [vmem:[%s559 + $0x34] sm:$0xf]
        %v574 = vld [vmem:[%s559 + $0x38] sm:$0xf]
        %v575 = vld [vmem:[%s559 + $0x3c] sm:$0xf]
        %v576 = vld [vmem:[%s559 + $0x40] sm:$0xf]
        %v577 = vld [vmem:[%s559 + $0x44] sm:$0xf]
        %v578 = vld [vmem:[%s559 + $0x48] sm:$0xf]
        %v579 = vld [vmem:[%s559 + $0x4c] sm:$0xf]
        %v580 = vld [vmem:[%s559 + $0x50] sm:$0xf]
        %v581 = vld [vmem:[%s559 + $0x54] sm:$0xf]
        %v582 = vld [vmem:[%s559 + $0x58] sm:$0xf]
        %v583 = vld [vmem:[%s559 + $0x5c] sm:$0xf]
        %v584 = vld [vmem:[%s559 + $0x60] sm:$0xf]
        %v585 = vld [vmem:[%s559 + $0x64] sm:$0xf]
        %v586 = vld [vmem:[%s559 + $0x68] sm:$0xf]
        %v587 = vld [vmem:[%s559 + $0x6c] sm:$0xf]
        %v588 = vld [vmem:[%s559 + $0x70] sm:$0xf]
        %v589 = vld [vmem:[%s559 + $0x74] sm:$0xf]
        %v590 = vld [vmem:[%s559 + $0x78] sm:$0xf]
        %v591 = vld [vmem:[%s559 + $0x7c] sm:$0xf]
        %v608 = vunpack.c.l.b16 %v543
        %v609 = vunpack.c.h.b16 %v543
        %v610 = vunpack.c.l.b16 %v544
        %v611 = vunpack.c.h.b16 %v544
        %v612 = vunpack.c.l.b16 %v545
        %v613 = vunpack.c.h.b16 %v545
        %v614 = vunpack.c.l.b16 %v546
        %v615 = vunpack.c.h.b16 %v546
        %v616 = vunpack.c.l.b16 %v547
        %v617 = vunpack.c.h.b16 %v547
        %v618 = vunpack.c.l.b16 %v548
        %v619 = vunpack.c.h.b16 %v548
        %v620 = vunpack.c.l.b16 %v549
        %v621 = vunpack.c.h.b16 %v549
        %v622 = vunpack.c.l.b16 %v550
        %v623 = vunpack.c.h.b16 %v550
        %v624 = vunpack.c.l.b16 %v551
        %v625 = vunpack.c.h.b16 %v551
        %v626 = vunpack.c.l.b16 %v552
        %v627 = vunpack.c.h.b16 %v552
        %v628 = vunpack.c.l.b16 %v553
        %v629 = vunpack.c.h.b16 %v553
        %v630 = vunpack.c.l.b16 %v554
        %v631 = vunpack.c.h.b16 %v554
        %v632 = vunpack.c.l.b16 %v555
        %v633 = vunpack.c.h.b16 %v555
        %v634 = vunpack.c.l.b16 %v556
        %v635 = vunpack.c.h.b16 %v556
        %v636 = vunpack.c.l.b16 %v557
        %v637 = vunpack.c.h.b16 %v557
        %v638 = vunpack.c.l.b16 %v558
        %v639 = vunpack.c.h.b16 %v558
        %v640 = vpack.c.b16 %v610, %v608
        %v641 = vpack.c.b16 %v611, %v609
        %v642 = vpack.c.b16 %v614, %v612
        %v643 = vpack.c.b16 %v615, %v613
        %v644 = vpack.c.b16 %v618, %v616
        %v645 = vpack.c.b16 %v619, %v617
        %v646 = vpack.c.b16 %v622, %v620
        %v647 = vpack.c.b16 %v623, %v621
        %v648 = vpack.c.b16 %v626, %v624
        %v649 = vpack.c.b16 %v627, %v625
        %v650 = vpack.c.b16 %v630, %v628
        %v651 = vpack.c.b16 %v631, %v629
        %v652 = vpack.c.b16 %v634, %v632
        %v653 = vpack.c.b16 %v635, %v633
        %v654 = vpack.c.b16 %v638, %v636
        %v655 = vpack.c.b16 %v639, %v637
        %v704 = vunpack.c.l.b16 %v560
        %v705 = vunpack.c.l.b16 %v561
        %v706 = vunpack.c.l.b16 %v562
        %v707 = vunpack.c.l.b16 %v563
        %v708 = vunpack.c.l.b16 %v564
        %v709 = vunpack.c.l.b16 %v565
        %v710 = vunpack.c.l.b16 %v566
        %v711 = vunpack.c.l.b16 %v567
        %v712 = vunpack.c.l.b16 %v568
        %v713 = vunpack.c.l.b16 %v569
        %v714 = vunpack.c.l.b16 %v570
        %v715 = vunpack.c.l.b16 %v571
        %v716 = vunpack.c.l.b16 %v572
        %v717 = vunpack.c.l.b16 %v573
        %v718 = vunpack.c.l.b16 %v574
        %v719 = vunpack.c.l.b16 %v575
        %v720 = vunpack.c.l.b16 %v576
        %v721 = vunpack.c.l.b16 %v577
        %v722 = vunpack.c.l.b16 %v578
        %v723 = vunpack.c.l.b16 %v579
        %v724 = vunpack.c.l.b16 %v580
        %v725 = vunpack.c.l.b16 %v581
        %v726 = vunpack.c.l.b16 %v582
        %v727 = vunpack.c.l.b16 %v583
        %v728 = vunpack.c.l.b16 %v584
        %v729 = vunpack.c.l.b16 %v585
        %v730 = vunpack.c.l.b16 %v586
        %v731 = vunpack.c.l.b16 %v587
        %v732 = vunpack.c.l.b16 %v588
        %v733 = vunpack.c.l.b16 %v589
        %v734 = vunpack.c.l.b16 %v590
        %v735 = vunpack.c.l.b16 %v591
        %v736 = vpack.c.b16 %v705, %v704
        %v737 = vpack.c.b16 %v707, %v706
        %v738 = vpack.c.b16 %v709, %v708
        %v739 = vpack.c.b16 %v711, %v710
        %v740 = vpack.c.b16 %v713, %v712
        %v741 = vpack.c.b16 %v715, %v714
        %v742 = vpack.c.b16 %v717, %v716
        %v743 = vpack.c.b16 %v719, %v718
        %v744 = vpack.c.b16 %v721, %v720
        %v745 = vpack.c.b16 %v723, %v722
        %v746 = vpack.c.b16 %v725, %v724
        %v747 = vpack.c.b16 %v727, %v726
        %v748 = vpack.c.b16 %v729, %v728
        %v749 = vpack.c.b16 %v731, %v730
        %v750 = vpack.c.b16 %v733, %v732
        %v751 = vpack.c.b16 %v735, %v734
        %768 = vmatprep.subr.bf16.mxu0 0
        %769 = vmatpush1.bf16.msra.mxu0 %v736
        %770 = vmatprep.subr.bf16.mxu0 0
        %771 = vmatpush1.bf16.msra.mxu0 %v737
        %772 = vmatprep.subr.bf16.mxu0 0
        %773 = vmatpush1.bf16.msra.mxu0 %v738
        %774 = vmatprep.subr.bf16.mxu0 0
        %775 = vmatpush1.bf16.msra.mxu0 %v739
        %776 = vmatprep.subr.bf16.mxu0 0
        %777 = vmatpush1.bf16.msra.mxu0 %v740
        %778 = vmatprep.subr.bf16.mxu0 0
        %779 = vmatpush1.bf16.msra.mxu0 %v741
        %780 = vmatprep.subr.bf16.mxu0 0
        %781 = vmatpush1.bf16.msra.mxu0 %v742
        %782 = vmatprep.subr.bf16.mxu0 0
        %783 = vmatpush1.bf16.msra.mxu0 %v743
        %784 = vmatprep.subr.bf16.mxu0 0
        %785 = vmatpush1.bf16.msra.mxu0 %v744
        %786 = vmatprep.subr.bf16.mxu0 0
        %787 = vmatpush1.bf16.msra.mxu0 %v745
        %788 = vmatprep.subr.bf16.mxu0 0
        %789 = vmatpush1.bf16.msra.mxu0 %v746
        %790 = vmatprep.subr.bf16.mxu0 0
        %791 = vmatpush1.bf16.msra.mxu0 %v747
        %792 = vmatprep.subr.bf16.mxu0 0
        %793 = vmatpush1.bf16.msra.mxu0 %v748
        %794 = vmatprep.subr.bf16.mxu0 0
        %795 = vmatpush1.bf16.msra.mxu0 %v749
        %796 = vmatprep.subr.bf16.mxu0 0
        %797 = vmatpush1.bf16.msra.mxu0 %v750
        %798 = vmatprep.subr.bf16.mxu0 0
        %799 = vmatpush1.bf16.msra.mxu0 %v751
        %800 = vmatprep.mubr.bf16.mxu0 %v641
        %801 = vmatmul.mubr.bf16.gmra.mrb[0].mxu0 %v640
        %v802 = vpop.f32.mrb[0].mxu0
        %v803 = vadd.f32 0.0, %v802
        %v804 = vpop.f32.mrb[0].mxu0
        %v805 = vpop.f32.mrb[0].mxu0
        %v806 = vadd.f32 0.0, %v805
        %v807 = vpop.f32.mrb[0].mxu0
        %808 = vmatprep.mubr.bf16.mxu0 %v643
        %809 = vmatmul.mubr.bf16.gmra.mrb[0].mxu0 %v642
        %v810 = vpop.f32.mrb[0].mxu0
        %v811 = vadd.f32 0.0, %v810
        %v812 = vpop.f32.mrb[0].mxu0
        %v813 = vpop.f32.mrb[0].mxu0
        %v814 = vadd.f32 0.0, %v813
        %v815 = vpop.f32.mrb[0].mxu0
        %816 = vmatprep.mubr.bf16.mxu0 %v645
        %817 = vmatmul.mubr.bf16.gmra.mrb[0].mxu0 %v644
        %v818 = vpop.f32.mrb[0].mxu0
        %v819 = vadd.f32 0.0, %v818
        %v820 = vpop.f32.mrb[0].mxu0
        %v821 = vpop.f32.mrb[0].mxu0
        %v822 = vadd.f32 0.0, %v821
        %v823 = vpop.f32.mrb[0].mxu0
        %824 = vmatprep.mubr.bf16.mxu0 %v647
        %825 = vmatmul.mubr.bf16.gmra.mrb[0].mxu0 %v646
        %v826 = vpop.f32.mrb[0].mxu0
        %v827 = vadd.f32 0.0, %v826
        %v828 = vpop.f32.mrb[0].mxu0
        %v829 = vpop.f32.mrb[0].mxu0
        %v830 = vadd.f32 0.0, %v829
        %v831 = vpop.f32.mrb[0].mxu0
        %832 = vmatprep.mubr.bf16.mxu0 %v649
        %833 = vmatmul.mubr.bf16.gmra.mrb[0].mxu0 %v648
        %v834 = vpop.f32.mrb[0].mxu0
        %v835 = vadd.f32 0.0, %v834
        %v836 = vpop.f32.mrb[0].mxu0
        %v837 = vpop.f32.mrb[0].mxu0
        %v838 = vadd.f32 0.0, %v837
        %v839 = vpop.f32.mrb[0].mxu0
        %840 = vmatprep.mubr.bf16.mxu0 %v651
        %841 = vmatmul.mubr.bf16.gmra.mrb[0].mxu0 %v650
        %v842 = vpop.f32.mrb[0].mxu0
        %v843 = vadd.f32 0.0, %v842
        %v844 = vpop.f32.mrb[0].mxu0
        %v845 = vpop.f32.mrb[0].mxu0
        %v846 = vadd.f32 0.0, %v845
        %v847 = vpop.f32.mrb[0].mxu0
        %848 = vmatprep.mubr.bf16.mxu0 %v653
        %849 = vmatmul.mubr.bf16.gmra.mrb[0].mxu0 %v652
        %v850 = vpop.f32.mrb[0].mxu0
        %v851 = vadd.f32 0.0, %v850
        %v852 = vpop.f32.mrb[0].mxu0
        %v853 = vpop.f32.mrb[0].mxu0
        %v854 = vadd.f32 0.0, %v853
        %v855 = vpop.f32.mrb[0].mxu0
        %856 = vmatprep.mubr.bf16.mxu0 %v655
        %857 = vmatmul.mubr.bf16.gmra.mrb[0].mxu0 %v654
        %v858 = vpop.f32.mrb[0].mxu0
        %v859 = vadd.f32 0.0, %v858
        %v860 = vpop.f32.mrb[0].mxu0
        %v861 = vpop.f32.mrb[0].mxu0
        %v862 = vadd.f32 0.0, %v861
        %v863 = vpop.f32.mrb[0].mxu0
        %864 = vdwg.mxu0
        %v865 = vld [vmem:[#allocation2] sm:$0xff]
        %v866 = vld [vmem:[#allocation2 + $0x8] sm:$0xff]
        %v867 = vld [vmem:[#allocation2 + $0x10] sm:$0xff]
        %v868 = vld [vmem:[#allocation2 + $0x18] sm:$0xff]
        %v869 = vld [vmem:[#allocation2 + $0x20] sm:$0xff]
        %v870 = vld [vmem:[#allocation2 + $0x28] sm:$0xff]
        %v871 = vld [vmem:[#allocation2 + $0x30] sm:$0xff]
        %v872 = vld [vmem:[#allocation2 + $0x38] sm:$0xff]
        %v873 = vld [vmem:[#allocation2 + $0x40] sm:$0xff]
        %v874 = vld [vmem:[#allocation2 + $0x48] sm:$0xff]
        %v875 = vld [vmem:[#allocation2 + $0x50] sm:$0xff]
        %v876 = vld [vmem:[#allocation2 + $0x58] sm:$0xff]
        %v877 = vld [vmem:[#allocation2 + $0x60] sm:$0xff]
        %v878 = vld [vmem:[#allocation2 + $0x68] sm:$0xff]
        %v879 = vld [vmem:[#allocation2 + $0x70] sm:$0xff]
        %v880 = vld [vmem:[#allocation2 + $0x78] sm:$0xff]
        %v881 = vadd.f32 %v865, %v803
        %v882 = vadd.f32 %v866, %v806
        %v883 = vadd.f32 %v867, %v811
        %v884 = vadd.f32 %v868, %v814
        %v885 = vadd.f32 %v869, %v819
        %v886 = vadd.f32 %v870, %v822
        %v887 = vadd.f32 %v871, %v827
        %v888 = vadd.f32 %v872, %v830
        %v889 = vadd.f32 %v873, %v835
        %v890 = vadd.f32 %v874, %v838
        %v891 = vadd.f32 %v875, %v843
        %v892 = vadd.f32 %v876, %v846
        %v893 = vadd.f32 %v877, %v851
        %v894 = vadd.f32 %v878, %v854
        %v895 = vadd.f32 %v879, %v859
        %v896 = vadd.f32 %v880, %v862
        %897 = vst [vmem:[#allocation2] sm:$0xff] %v881
        %898 = vst [vmem:[#allocation2 + $0x8] sm:$0xff] %v882
        %899 = vst [vmem:[#allocation2 + $0x10] sm:$0xff] %v883
        %900 = vst [vmem:[#allocation2 + $0x18] sm:$0xff] %v884
        %901 = vst [vmem:[#allocation2 + $0x20] sm:$0xff] %v885
        %902 = vst [vmem:[#allocation2 + $0x28] sm:$0xff] %v886
        %903 = vst [vmem:[#allocation2 + $0x30] sm:$0xff] %v887
        %904 = vst [vmem:[#allocation2 + $0x38] sm:$0xff] %v888
        %905 = vst [vmem:[#allocation2 + $0x40] sm:$0xff] %v889
        %906 = vst [vmem:[#allocation2 + $0x48] sm:$0xff] %v890
        %907 = vst [vmem:[#allocation2 + $0x50] sm:$0xff] %v891
        %908 = vst [vmem:[#allocation2 + $0x58] sm:$0xff] %v892
        %909 = vst [vmem:[#allocation2 + $0x60] sm:$0xff] %v893
        %910 = vst [vmem:[#allocation2 + $0x68] sm:$0xff] %v894
        %911 = vst [vmem:[#allocation2 + $0x70] sm:$0xff] %v895
        %912 = vst [vmem:[#allocation2 + $0x78] sm:$0xff] %v896
        %s913 = scalar_lea.vmem %s177, 32 [#allocation3]
        %v914 = vld [vmem:[%s913] sm:$0xff]
        %v915 = vld [vmem:[%s913 + $0x8] sm:$0xff]
        %v916 = vld [vmem:[%s913 + $0x10] sm:$0xff]
        %v917 = vld [vmem:[%s913 + $0x18] sm:$0xff]
        %v918 = vld [vmem:[%s913 + $0x20] sm:$0xff]
        %v919 = vld [vmem:[%s913 + $0x28] sm:$0xff]
        %v920 = vld [vmem:[%s913 + $0x30] sm:$0xff]
        %v921 = vld [vmem:[%s913 + $0x38] sm:$0xff]
        %v922 = vld [vmem:[%s913 + $0x40] sm:$0xff]
        %v923 = vld [vmem:[%s913 + $0x48] sm:$0xff]
        %v924 = vld [vmem:[%s913 + $0x50] sm:$0xff]
        %v925 = vld [vmem:[%s913 + $0x58] sm:$0xff]
        %v926 = vld [vmem:[%s913 + $0x60] sm:$0xff]
        %v927 = vld [vmem:[%s913 + $0x68] sm:$0xff]
        %v928 = vld [vmem:[%s913 + $0x70] sm:$0xff]
        %v929 = vld [vmem:[%s913 + $0x78] sm:$0xff]
        %s930 = scalar_lea.vmem [#allocation6], 256
        %v931 = vld [vmem:[%s930] sm:$0xf]
        %v932 = vld [vmem:[%s930 + $0x4] sm:$0xf]
        %v933 = vld [vmem:[%s930 + $0x8] sm:$0xf]
        %v934 = vld [vmem:[%s930 + $0xc] sm:$0xf]
        %v935 = vld [vmem:[%s930 + $0x10] sm:$0xf]
        %v936 = vld [vmem:[%s930 + $0x14] sm:$0xf]
        %v937 = vld [vmem:[%s930 + $0x18] sm:$0xf]
        %v938 = vld [vmem:[%s930 + $0x1c] sm:$0xf]
        %v939 = vld [vmem:[%s930 + $0x20] sm:$0xf]
        %v940 = vld [vmem:[%s930 + $0x24] sm:$0xf]
        %v941 = vld [vmem:[%s930 + $0x28] sm:$0xf]
        %v942 = vld [vmem:[%s930 + $0x2c] sm:$0xf]
        %v943 = vld [vmem:[%s930 + $0x30] sm:$0xf]
        %v944 = vld [vmem:[%s930 + $0x34] sm:$0xf]
        %v945 = vld [vmem:[%s930 + $0x38] sm:$0xf]
        %v946 = vld [vmem:[%s930 + $0x3c] sm:$0xf]
        %v947 = vld [vmem:[%s930 + $0x40] sm:$0xf]
        %v948 = vld [vmem:[%s930 + $0x44] sm:$0xf]
        %v949 = vld [vmem:[%s930 + $0x48] sm:$0xf]
        %v950 = vld [vmem:[%s930 + $0x4c] sm:$0xf]
        %v951 = vld [vmem:[%s930 + $0x50] sm:$0xf]
        %v952 = vld [vmem:[%s930 + $0x54] sm:$0xf]
        %v953 = vld [vmem:[%s930 + $0x58] sm:$0xf]
        %v954 = vld [vmem:[%s930 + $0x5c] sm:$0xf]
        %v955 = vld [vmem:[%s930 + $0x60] sm:$0xf]
        %v956 = vld [vmem:[%s930 + $0x64] sm:$0xf]
        %v957 = vld [vmem:[%s930 + $0x68] sm:$0xf]
        %v958 = vld [vmem:[%s930 + $0x6c] sm:$0xf]
        %v959 = vld [vmem:[%s930 + $0x70] sm:$0xf]
        %v960 = vld [vmem:[%s930 + $0x74] sm:$0xf]
        %v961 = vld [vmem:[%s930 + $0x78] sm:$0xf]
        %v962 = vld [vmem:[%s930 + $0x7c] sm:$0xf]
        %v979 = vunpack.c.l.b16 %v914
        %v980 = vunpack.c.h.b16 %v914
        %v981 = vunpack.c.l.b16 %v915
        %v982 = vunpack.c.h.b16 %v915
        %v983 = vunpack.c.l.b16 %v916
        %v984 = vunpack.c.h.b16 %v916
        %v985 = vunpack.c.l.b16 %v917
        %v986 = vunpack.c.h.b16 %v917
        %v987 = vunpack.c.l.b16 %v918
        %v988 = vunpack.c.h.b16 %v918
        %v989 = vunpack.c.l.b16 %v919
        %v990 = vunpack.c.h.b16 %v919
        %v991 = vunpack.c.l.b16 %v920
        %v992 = vunpack.c.h.b16 %v920
        %v993 = vunpack.c.l.b16 %v921
        %v994 = vunpack.c.h.b16 %v921
        %v995 = vunpack.c.l.b16 %v922
        %v996 = vunpack.c.h.b16 %v922
        %v997 = vunpack.c.l.b16 %v923
        %v998 = vunpack.c.h.b16 %v923
        %v999 = vunpack.c.l.b16 %v924
        %v1000 = vunpack.c.h.b16 %v924
        %v1001 = vunpack.c.l.b16 %v925
        %v1002 = vunpack.c.h.b16 %v925
        %v1003 = vunpack.c.l.b16 %v926
        %v1004 = vunpack.c.h.b16 %v926
        %v1005 = vunpack.c.l.b16 %v927
        %v1006 = vunpack.c.h.b16 %v927
        %v1007 = vunpack.c.l.b16 %v928
        %v1008 = vunpack.c.h.b16 %v928
        %v1009 = vunpack.c.l.b16 %v929
        %v1010 = vunpack.c.h.b16 %v929
        %v1011 = vpack.c.b16 %v981, %v979
        %v1012 = vpack.c.b16 %v982, %v980
        %v1013 = vpack.c.b16 %v985, %v983
        %v1014 = vpack.c.b16 %v986, %v984
        %v1015 = vpack.c.b16 %v989, %v987
        %v1016 = vpack.c.b16 %v990, %v988
        %v1017 = vpack.c.b16 %v993, %v991
        %v1018 = vpack.c.b16 %v994, %v992
        %v1019 = vpack.c.b16 %v997, %v995
        %v1020 = vpack.c.b16 %v998, %v996
        %v1021 = vpack.c.b16 %v1001, %v999
        %v1022 = vpack.c.b16 %v1002, %v1000
        %v1023 = vpack.c.b16 %v1005, %v1003
        %v1024 = vpack.c.b16 %v1006, %v1004
        %v1025 = vpack.c.b16 %v1009, %v1007
        %v1026 = vpack.c.b16 %v1010, %v1008
        %v1075 = vunpack.c.l.b16 %v931
        %v1076 = vunpack.c.l.b16 %v932
        %v1077 = vunpack.c.l.b16 %v933
        %v1078 = vunpack.c.l.b16 %v934
        %v1079 = vunpack.c.l.b16 %v935
        %v1080 = vunpack.c.l.b16 %v936
        %v1081 = vunpack.c.l.b16 %v937
        %v1082 = vunpack.c.l.b16 %v938
        %v1083 = vunpack.c.l.b16 %v939
        %v1084 = vunpack.c.l.b16 %v940
        %v1085 = vunpack.c.l.b16 %v941
        %v1086 = vunpack.c.l.b16 %v942
        %v1087 = vunpack.c.l.b16 %v943
        %v1088 = vunpack.c.l.b16 %v944
        %v1089 = vunpack.c.l.b16 %v945
        %v1090 = vunpack.c.l.b16 %v946
        %v1091 = vunpack.c.l.b16 %v947
        %v1092 = vunpack.c.l.b16 %v948
        %v1093 = vunpack.c.l.b16 %v949
        %v1094 = vunpack.c.l.b16 %v950
        %v1095 = vunpack.c.l.b16 %v951
        %v1096 = vunpack.c.l.b16 %v952
        %v1097 = vunpack.c.l.b16 %v953
        %v1098 = vunpack.c.l.b16 %v954
        %v1099 = vunpack.c.l.b16 %v955
        %v1100 = vunpack.c.l.b16 %v956
        %v1101 = vunpack.c.l.b16 %v957
        %v1102 = vunpack.c.l.b16 %v958
        %v1103 = vunpack.c.l.b16 %v959
        %v1104 = vunpack.c.l.b16 %v960
        %v1105 = vunpack.c.l.b16 %v961
        %v1106 = vunpack.c.l.b16 %v962
        %v1107 = vpack.c.b16 %v1076, %v1075
        %v1108 = vpack.c.b16 %v1078, %v1077
        %v1109 = vpack.c.b16 %v1080, %v1079
        %v1110 = vpack.c.b16 %v1082, %v1081
        %v1111 = vpack.c.b16 %v1084, %v1083
        %v1112 = vpack.c.b16 %v1086, %v1085
        %v1113 = vpack.c.b16 %v1088, %v1087
        %v1114 = vpack.c.b16 %v1090, %v1089
        %v1115 = vpack.c.b16 %v1092, %v1091
        %v1116 = vpack.c.b16 %v1094, %v1093
        %v1117 = vpack.c.b16 %v1096, %v1095
        %v1118 = vpack.c.b16 %v1098, %v1097
        %v1119 = vpack.c.b16 %v1100, %v1099
        %v1120 = vpack.c.b16 %v1102, %v1101
        %v1121 = vpack.c.b16 %v1104, %v1103
        %v1122 = vpack.c.b16 %v1106, %v1105
        %1139 = vmatprep.subr.bf16.mxu0 0
        %1140 = vmatpush1.bf16.msra.mxu0 %v1107
        %1141 = vmatprep.subr.bf16.mxu0 0
        %1142 = vmatpush1.bf16.msra.mxu0 %v1108
        %1143 = vmatprep.subr.bf16.mxu0 0
        %1144 = vmatpush1.bf16.msra.mxu0 %v1109
        %1145 = vmatprep.subr.bf16.mxu0 0
        %1146 = vmatpush1.bf16.msra.mxu0 %v1110
        %1147 = vmatprep.subr.bf16.mxu0 0
        %1148 = vmatpush1.bf16.msra.mxu0 %v1111
        %1149 = vmatprep.subr.bf16.mxu0 0
        %1150 = vmatpush1.bf16.msra.mxu0 %v1112
        %1151 = vmatprep.subr.bf16.mxu0 0
        %1152 = vmatpush1.bf16.msra.mxu0 %v1113
        %1153 = vmatprep.subr.bf16.mxu0 0
        %1154 = vmatpush1.bf16.msra.mxu0 %v1114
        %1155 = vmatprep.subr.bf16.mxu0 0
        %1156 = vmatpush1.bf16.msra.mxu0 %v1115
        %1157 = vmatprep.subr.bf16.mxu0 0
        %1158 = vmatpush1.bf16.msra.mxu0 %v1116
        %1159 = vmatprep.subr.bf16.mxu0 0
        %1160 = vmatpush1.bf16.msra.mxu0 %v1117
        %1161 = vmatprep.subr.bf16.mxu0 0
        %1162 = vmatpush1.bf16.msra.mxu0 %v1118
        %1163 = vmatprep.subr.bf16.mxu0 0
        %1164 = vmatpush1.bf16.msra.mxu0 %v1119
        %1165 = vmatprep.subr.bf16.mxu0 0
        %1166 = vmatpush1.bf16.msra.mxu0 %v1120
        %1167 = vmatprep.subr.bf16.mxu0 0
        %1168 = vmatpush1.bf16.msra.mxu0 %v1121
        %1169 = vmatprep.subr.bf16.mxu0 0
        %1170 = vmatpush1.bf16.msra.mxu0 %v1122
        %1171 = vmatprep.mubr.bf16.mxu0 %v1012
        %1172 = vmatmul.mubr.bf16.gmra.mrb[0].mxu0 %v1011
        %v1173 = vpop.f32.mrb[0].mxu0
        %v1174 = vadd.f32 0.0, %v1173
        %v1175 = vpop.f32.mrb[0].mxu0
        %v1176 = vpop.f32.mrb[0].mxu0
        %v1177 = vadd.f32 0.0, %v1176
        %v1178 = vpop.f32.mrb[0].mxu0
        %1179 = vmatprep.mubr.bf16.mxu0 %v1014
        %1180 = vmatmul.mubr.bf16.gmra.mrb[0].mxu0 %v1013
        %v1181 = vpop.f32.mrb[0].mxu0
        %v1182 = vadd.f32 0.0, %v1181
        %v1183 = vpop.f32.mrb[0].mxu0
        %v1184 = vpop.f32.mrb[0].mxu0
        %v1185 = vadd.f32 0.0, %v1184
        %v1186 = vpop.f32.mrb[0].mxu0
        %1187 = vmatprep.mubr.bf16.mxu0 %v1016
        %1188 = vmatmul.mubr.bf16.gmra.mrb[0].mxu0 %v1015
        %v1189 = vpop.f32.mrb[0].mxu0
        %v1190 = vadd.f32 0.0, %v1189
        %v1191 = vpop.f32.mrb[0].mxu0
        %v1192 = vpop.f32.mrb[0].mxu0
        %v1193 = vadd.f32 0.0, %v1192
        %v1194 = vpop.f32.mrb[0].mxu0
        %1195 = vmatprep.mubr.bf16.mxu0 %v1018
        %1196 = vmatmul.mubr.bf16.gmra.mrb[0].mxu0 %v1017
        %v1197 = vpop.f32.mrb[0].mxu0
        %v1198 = vadd.f32 0.0, %v1197
        %v1199 = vpop.f32.mrb[0].mxu0
        %v1200 = vpop.f32.mrb[0].mxu0
        %v1201 = vadd.f32 0.0, %v1200
        %v1202 = vpop.f32.mrb[0].mxu0
        %1203 = vmatprep.mubr.bf16.mxu0 %v1020
        %1204 = vmatmul.mubr.bf16.gmra.mrb[0].mxu0 %v1019
        %v1205 = vpop.f32.mrb[0].mxu0
        %v1206 = vadd.f32 0.0, %v1205
        %v1207 = vpop.f32.mrb[0].mxu0
        %v1208 = vpop.f32.mrb[0].mxu0
        %v1209 = vadd.f32 0.0, %v1208
        %v1210 = vpop.f32.mrb[0].mxu0
        %1211 = vmatprep.mubr.bf16.mxu0 %v1022
        %1212 = vmatmul.mubr.bf16.gmra.mrb[0].mxu0 %v1021
        %v1213 = vpop.f32.mrb[0].mxu0
        %v1214 = vadd.f32 0.0, %v1213
        %v1215 = vpop.f32.mrb[0].mxu0
        %v1216 = vpop.f32.mrb[0].mxu0
        %v1217 = vadd.f32 0.0, %v1216
        %v1218 = vpop.f32.mrb[0].mxu0
        %1219 = vmatprep.mubr.bf16.mxu0 %v1024
        %1220 = vmatmul.mubr.bf16.gmra.mrb[0].mxu0 %v1023
        %v1221 = vpop.f32.mrb[0].mxu0
        %v1222 = vadd.f32 0.0, %v1221
        %v1223 = vpop.f32.mrb[0].mxu0
        %v1224 = vpop.f32.mrb[0].mxu0
        %v1225 = vadd.f32 0.0, %v1224
        %v1226 = vpop.f32.mrb[0].mxu0
        %1227 = vmatprep.mubr.bf16.mxu0 %v1026
        %1228 = vmatmul.mubr.bf16.gmra.mrb[0].mxu0 %v1025
        %v1229 = vpop.f32.mrb[0].mxu0
        %v1230 = vadd.f32 0.0, %v1229
        %v1231 = vpop.f32.mrb[0].mxu0
        %v1232 = vpop.f32.mrb[0].mxu0
        %v1233 = vadd.f32 0.0, %v1232
        %v1234 = vpop.f32.mrb[0].mxu0
        %1235 = vdwg.mxu0
        %v1236 = vld [vmem:[#allocation2] sm:$0xff]
        %v1237 = vld [vmem:[#allocation2 + $0x8] sm:$0xff]
        %v1238 = vld [vmem:[#allocation2 + $0x10] sm:$0xff]
        %v1239 = vld [vmem:[#allocation2 + $0x18] sm:$0xff]
        %v1240 = vld [vmem:[#allocation2 + $0x20] sm:$0xff]
        %v1241 = vld [vmem:[#allocation2 + $0x28] sm:$0xff]
        %v1242 = vld [vmem:[#allocation2 + $0x30] sm:$0xff]
        %v1243 = vld [vmem:[#allocation2 + $0x38] sm:$0xff]
        %v1244 = vld [vmem:[#allocation2 + $0x40] sm:$0xff]
        %v1245 = vld [vmem:[#allocation2 + $0x48] sm:$0xff]
        %v1246 = vld [vmem:[#allocation2 + $0x50] sm:$0xff]
        %v1247 = vld [vmem:[#allocation2 + $0x58] sm:$0xff]
        %v1248 = vld [vmem:[#allocation2 + $0x60] sm:$0xff]
        %v1249 = vld [vmem:[#allocation2 + $0x68] sm:$0xff]
        %v1250 = vld [vmem:[#allocation2 + $0x70] sm:$0xff]
        %v1251 = vld [vmem:[#allocation2 + $0x78] sm:$0xff]
        %v1252 = vadd.f32 %v1236, %v1174
        %v1253 = vadd.f32 %v1237, %v1177
        %v1254 = vadd.f32 %v1238, %v1182
        %v1255 = vadd.f32 %v1239, %v1185
        %v1256 = vadd.f32 %v1240, %v1190
        %v1257 = vadd.f32 %v1241, %v1193
        %v1258 = vadd.f32 %v1242, %v1198
        %v1259 = vadd.f32 %v1243, %v1201
        %v1260 = vadd.f32 %v1244, %v1206
        %v1261 = vadd.f32 %v1245, %v1209
        %v1262 = vadd.f32 %v1246, %v1214
        %v1263 = vadd.f32 %v1247, %v1217
        %v1264 = vadd.f32 %v1248, %v1222
        %v1265 = vadd.f32 %v1249, %v1225
        %v1266 = vadd.f32 %v1250, %v1230
        %v1267 = vadd.f32 %v1251, %v1233
        %1268 = vst [vmem:[#allocation2] sm:$0xff] %v1252
        %1269 = vst [vmem:[#allocation2 + $0x8] sm:$0xff] %v1253
        %1270 = vst [vmem:[#allocation2 + $0x10] sm:$0xff] %v1254
        %1271 = vst [vmem:[#allocation2 + $0x18] sm:$0xff] %v1255
        %1272 = vst [vmem:[#allocation2 + $0x20] sm:$0xff] %v1256
        %1273 = vst [vmem:[#allocation2 + $0x28] sm:$0xff] %v1257
        %1274 = vst [vmem:[#allocation2 + $0x30] sm:$0xff] %v1258
        %1275 = vst [vmem:[#allocation2 + $0x38] sm:$0xff] %v1259
        %1276 = vst [vmem:[#allocation2 + $0x40] sm:$0xff] %v1260
        %1277 = vst [vmem:[#allocation2 + $0x48] sm:$0xff] %v1261
        %1278 = vst [vmem:[#allocation2 + $0x50] sm:$0xff] %v1262
        %1279 = vst [vmem:[#allocation2 + $0x58] sm:$0xff] %v1263
        %1280 = vst [vmem:[#allocation2 + $0x60] sm:$0xff] %v1264
        %1281 = vst [vmem:[#allocation2 + $0x68] sm:$0xff] %v1265
        %1282 = vst [vmem:[#allocation2 + $0x70] sm:$0xff] %v1266
        %1283 = vst [vmem:[#allocation2 + $0x78] sm:$0xff] %v1267
        %s1284 = scalar_lea.vmem %s177, 48 [#allocation3]
        %v1285 = vld [vmem:[%s1284] sm:$0xff]
        %v1286 = vld [vmem:[%s1284 + $0x8] sm:$0xff]
        %v1287 = vld [vmem:[%s1284 + $0x10] sm:$0xff]
        %v1288 = vld [vmem:[%s1284 + $0x18] sm:$0xff]
        %v1289 = vld [vmem:[%s1284 + $0x20] sm:$0xff]
        %v1290 = vld [vmem:[%s1284 + $0x28] sm:$0xff]
        %v1291 = vld [vmem:[%s1284 + $0x30] sm:$0xff]
        %v1292 = vld [vmem:[%s1284 + $0x38] sm:$0xff]
        %v1293 = vld [vmem:[%s1284 + $0x40] sm:$0xff]
        %v1294 = vld [vmem:[%s1284 + $0x48] sm:$0xff]
        %v1295 = vld [vmem:[%s1284 + $0x50] sm:$0xff]
        %v1296 = vld [vmem:[%s1284 + $0x58] sm:$0xff]
        %v1297 = vld [vmem:[%s1284 + $0x60] sm:$0xff]
        %v1298 = vld [vmem:[%s1284 + $0x68] sm:$0xff]
        %v1299 = vld [vmem:[%s1284 + $0x70] sm:$0xff]
        %v1300 = vld [vmem:[%s1284 + $0x78] sm:$0xff]
        %s1301 = scalar_lea.vmem [#allocation6], 384
        %v1302 = vld [vmem:[%s1301] sm:$0xf]
        %v1303 = vld [vmem:[%s1301 + $0x4] sm:$0xf]
        %v1304 = vld [vmem:[%s1301 + $0x8] sm:$0xf]
        %v1305 = vld [vmem:[%s1301 + $0xc] sm:$0xf]
        %v1306 = vld [vmem:[%s1301 + $0x10] sm:$0xf]
        %v1307 = vld [vmem:[%s1301 + $0x14] sm:$0xf]
        %v1308 = vld [vmem:[%s1301 + $0x18] sm:$0xf]
        %v1309 = vld [vmem:[%s1301 + $0x1c] sm:$0xf]
        %v1310 = vld [vmem:[%s1301 + $0x20] sm:$0xf]
        %v1311 = vld [vmem:[%s1301 + $0x24] sm:$0xf]
        %v1312 = vld [vmem:[%s1301 + $0x28] sm:$0xf]
        %v1313 = vld [vmem:[%s1301 + $0x2c] sm:$0xf]
        %v1314 = vld [vmem:[%s1301 + $0x30] sm:$0xf]
        %v1315 = vld [vmem:[%s1301 + $0x34] sm:$0xf]
        %v1316 = vld [vmem:[%s1301 + $0x38] sm:$0xf]
        %v1317 = vld [vmem:[%s1301 + $0x3c] sm:$0xf]
        %v1318 = vld [vmem:[%s1301 + $0x40] sm:$0xf]
        %v1319 = vld [vmem:[%s1301 + $0x44] sm:$0xf]
        %v1320 = vld [vmem:[%s1301 + $0x48] sm:$0xf]
        %v1321 = vld [vmem:[%s1301 + $0x4c] sm:$0xf]
        %v1322 = vld [vmem:[%s1301 + $0x50] sm:$0xf]
        %v1323 = vld [vmem:[%s1301 + $0x54] sm:$0xf]
        %v1324 = vld [vmem:[%s1301 + $0x58] sm:$0xf]
        %v1325 = vld [vmem:[%s1301 + $0x5c] sm:$0xf]
        %v1326 = vld [vmem:[%s1301 + $0x60] sm:$0xf]
        %v1327 = vld [vmem:[%s1301 + $0x64] sm:$0xf]
        %v1328 = vld [vmem:[%s1301 + $0x68] sm:$0xf]
        %v1329 = vld [vmem:[%s1301 + $0x6c] sm:$0xf]
        %v1330 = vld [vmem:[%s1301 + $0x70] sm:$0xf]
        %v1331 = vld [vmem:[%s1301 + $0x74] sm:$0xf]
        %v1332 = vld [vmem:[%s1301 + $0x78] sm:$0xf]
        %v1333 = vld [vmem:[%s1301 + $0x7c] sm:$0xf]
        %v1350 = vunpack.c.l.b16 %v1285
        %v1351 = vunpack.c.h.b16 %v1285
        %v1352 = vunpack.c.l.b16 %v1286
        %v1353 = vunpack.c.h.b16 %v1286
        %v1354 = vunpack.c.l.b16 %v1287
        %v1355 = vunpack.c.h.b16 %v1287
        %v1356 = vunpack.c.l.b16 %v1288
        %v1357 = vunpack.c.h.b16 %v1288
        %v1358 = vunpack.c.l.b16 %v1289
        %v1359 = vunpack.c.h.b16 %v1289
        %v1360 = vunpack.c.l.b16 %v1290
        %v1361 = vunpack.c.h.b16 %v1290
        %v1362 = vunpack.c.l.b16 %v1291
        %v1363 = vunpack.c.h.b16 %v1291
        %v1364 = vunpack.c.l.b16 %v1292
        %v1365 = vunpack.c.h.b16 %v1292
        %v1366 = vunpack.c.l.b16 %v1293
        %v1367 = vunpack.c.h.b16 %v1293
        %v1368 = vunpack.c.l.b16 %v1294
        %v1369 = vunpack.c.h.b16 %v1294
        %v1370 = vunpack.c.l.b16 %v1295
        %v1371 = vunpack.c.h.b16 %v1295
        %v1372 = vunpack.c.l.b16 %v1296
        %v1373 = vunpack.c.h.b16 %v1296
        %v1374 = vunpack.c.l.b16 %v1297
        %v1375 = vunpack.c.h.b16 %v1297
        %v1376 = vunpack.c.l.b16 %v1298
        %v1377 = vunpack.c.h.b16 %v1298
        %v1378 = vunpack.c.l.b16 %v1299
        %v1379 = vunpack.c.h.b16 %v1299
        %v1380 = vunpack.c.l.b16 %v1300
        %v1381 = vunpack.c.h.b16 %v1300
        %v1382 = vpack.c.b16 %v1352, %v1350
        %v1383 = vpack.c.b16 %v1353, %v1351
        %v1384 = vpack.c.b16 %v1356, %v1354
        %v1385 = vpack.c.b16 %v1357, %v1355
        %v1386 = vpack.c.b16 %v1360, %v1358
        %v1387 = vpack.c.b16 %v1361, %v1359
        %v1388 = vpack.c.b16 %v1364, %v1362
        %v1389 = vpack.c.b16 %v1365, %v1363
        %v1390 = vpack.c.b16 %v1368, %v1366
        %v1391 = vpack.c.b16 %v1369, %v1367
        %v1392 = vpack.c.b16 %v1372, %v1370
        %v1393 = vpack.c.b16 %v1373, %v1371
        %v1394 = vpack.c.b16 %v1376, %v1374
        %v1395 = vpack.c.b16 %v1377, %v1375
        %v1396 = vpack.c.b16 %v1380, %v1378
        %v1397 = vpack.c.b16 %v1381, %v1379
        %v1446 = vunpack.c.l.b16 %v1302
        %v1447 = vunpack.c.l.b16 %v1303
        %v1448 = vunpack.c.l.b16 %v1304
        %v1449 = vunpack.c.l.b16 %v1305
        %v1450 = vunpack.c.l.b16 %v1306
        %v1451 = vunpack.c.l.b16 %v1307
        %v1452 = vunpack.c.l.b16 %v1308
        %v1453 = vunpack.c.l.b16 %v1309
        %v1454 = vunpack.c.l.b16 %v1310
        %v1455 = vunpack.c.l.b16 %v1311
        %v1456 = vunpack.c.l.b16 %v1312
        %v1457 = vunpack.c.l.b16 %v1313
        %v1458 = vunpack.c.l.b16 %v1314
        %v1459 = vunpack.c.l.b16 %v1315
        %v1460 = vunpack.c.l.b16 %v1316
        %v1461 = vunpack.c.l.b16 %v1317
        %v1462 = vunpack.c.l.b16 %v1318
        %v1463 = vunpack.c.l.b16 %v1319
        %v1464 = vunpack.c.l.b16 %v1320
        %v1465 = vunpack.c.l.b16 %v1321
        %v1466 = vunpack.c.l.b16 %v1322
        %v1467 = vunpack.c.l.b16 %v1323
        %v1468 = vunpack.c.l.b16 %v1324
        %v1469 = vunpack.c.l.b16 %v1325
        %v1470 = vunpack.c.l.b16 %v1326
        %v1471 = vunpack.c.l.b16 %v1327
        %v1472 = vunpack.c.l.b16 %v1328
        %v1473 = vunpack.c.l.b16 %v1329
        %v1474 = vunpack.c.l.b16 %v1330
        %v1475 = vunpack.c.l.b16 %v1331
        %v1476 = vunpack.c.l.b16 %v1332
        %v1477 = vunpack.c.l.b16 %v1333
        %v1478 = vpack.c.b16 %v1447, %v1446
        %v1479 = vpack.c.b16 %v1449, %v1448
        %v1480 = vpack.c.b16 %v1451, %v1450
        %v1481 = vpack.c.b16 %v1453, %v1452
        %v1482 = vpack.c.b16 %v1455, %v1454
        %v1483 = vpack.c.b16 %v1457, %v1456
        %v1484 = vpack.c.b16 %v1459, %v1458
        %v1485 = vpack.c.b16 %v1461, %v1460
        %v1486 = vpack.c.b16 %v1463, %v1462
        %v1487 = vpack.c.b16 %v1465, %v1464
        %v1488 = vpack.c.b16 %v1467, %v1466
        %v1489 = vpack.c.b16 %v1469, %v1468
        %v1490 = vpack.c.b16 %v1471, %v1470
        %v1491 = vpack.c.b16 %v1473, %v1472
        %v1492 = vpack.c.b16 %v1475, %v1474
        %v1493 = vpack.c.b16 %v1477, %v1476
        %1510 = vmatprep.subr.bf16.mxu0 0
        %1511 = vmatpush1.bf16.msra.mxu0 %v1478
        %1512 = vmatprep.subr.bf16.mxu0 0
        %1513 = vmatpush1.bf16.msra.mxu0 %v1479
        %1514 = vmatprep.subr.bf16.mxu0 0
        %1515 = vmatpush1.bf16.msra.mxu0 %v1480
        %1516 = vmatprep.subr.bf16.mxu0 0
        %1517 = vmatpush1.bf16.msra.mxu0 %v1481
        %1518 = vmatprep.subr.bf16.mxu0 0
        %1519 = vmatpush1.bf16.msra.mxu0 %v1482
        %1520 = vmatprep.subr.bf16.mxu0 0
        %1521 = vmatpush1.bf16.msra.mxu0 %v1483
        %1522 = vmatprep.subr.bf16.mxu0 0
        %1523 = vmatpush1.bf16.msra.mxu0 %v1484
        %1524 = vmatprep.subr.bf16.mxu0 0
        %1525 = vmatpush1.bf16.msra.mxu0 %v1485
        %1526 = vmatprep.subr.bf16.mxu0 0
        %1527 = vmatpush1.bf16.msra.mxu0 %v1486
        %1528 = vmatprep.subr.bf16.mxu0 0
        %1529 = vmatpush1.bf16.msra.mxu0 %v1487
        %1530 = vmatprep.subr.bf16.mxu0 0
        %1531 = vmatpush1.bf16.msra.mxu0 %v1488
        %1532 = vmatprep.subr.bf16.mxu0 0
        %1533 = vmatpush1.bf16.msra.mxu0 %v1489
        %1534 = vmatprep.subr.bf16.mxu0 0
        %1535 = vmatpush1.bf16.msra.mxu0 %v1490
        %1536 = vmatprep.subr.bf16.mxu0 0
        %1537 = vmatpush1.bf16.msra.mxu0 %v1491
        %1538 = vmatprep.subr.bf16.mxu0 0
        %1539 = vmatpush1.bf16.msra.mxu0 %v1492
        %1540 = vmatprep.subr.bf16.mxu0 0
        %1541 = vmatpush1.bf16.msra.mxu0 %v1493
        %1542 = vmatprep.mubr.bf16.mxu0 %v1383
        %1543 = vmatmul.mubr.bf16.gmra.mrb[0].mxu0 %v1382
        %v1544 = vpop.f32.mrb[0].mxu0
        %v1545 = vadd.f32 0.0, %v1544
        %v1546 = vpop.f32.mrb[0].mxu0
        %v1547 = vpop.f32.mrb[0].mxu0
        %v1548 = vadd.f32 0.0, %v1547
        %v1549 = vpop.f32.mrb[0].mxu0
        %1550 = vmatprep.mubr.bf16.mxu0 %v1385
        %1551 = vmatmul.mubr.bf16.gmra.mrb[0].mxu0 %v1384
        %v1552 = vpop.f32.mrb[0].mxu0
        %v1553 = vadd.f32 0.0, %v1552
        %v1554 = vpop.f32.mrb[0].mxu0
        %v1555 = vpop.f32.mrb[0].mxu0
        %v1556 = vadd.f32 0.0, %v1555
        %v1557 = vpop.f32.mrb[0].mxu0
        %1558 = vmatprep.mubr.bf16.mxu0 %v1387
        %1559 = vmatmul.mubr.bf16.gmra.mrb[0].mxu0 %v1386
        %v1560 = vpop.f32.mrb[0].mxu0
        %v1561 = vadd.f32 0.0, %v1560
        %v1562 = vpop.f32.mrb[0].mxu0
        %v1563 = vpop.f32.mrb[0].mxu0
        %v1564 = vadd.f32 0.0, %v1563
        %v1565 = vpop.f32.mrb[0].mxu0
        %1566 = vmatprep.mubr.bf16.mxu0 %v1389
        %1567 = vmatmul.mubr.bf16.gmra.mrb[0].mxu0 %v1388
        %v1568 = vpop.f32.mrb[0].mxu0
        %v1569 = vadd.f32 0.0, %v1568
        %v1570 = vpop.f32.mrb[0].mxu0
        %v1571 = vpop.f32.mrb[0].mxu0
        %v1572 = vadd.f32 0.0, %v1571
        %v1573 = vpop.f32.mrb[0].mxu0
        %1574 = vmatprep.mubr.bf16.mxu0 %v1391
        %1575 = vmatmul.mubr.bf16.gmra.mrb[0].mxu0 %v1390
        %v1576 = vpop.f32.mrb[0].mxu0
        %v1577 = vadd.f32 0.0, %v1576
        %v1578 = vpop.f32.mrb[0].mxu0
        %v1579 = vpop.f32.mrb[0].mxu0
        %v1580 = vadd.f32 0.0, %v1579
        %v1581 = vpop.f32.mrb[0].mxu0
        %1582 = vmatprep.mubr.bf16.mxu0 %v1393
        %1583 = vmatmul.mubr.bf16.gmra.mrb[0].mxu0 %v1392
        %v1584 = vpop.f32.mrb[0].mxu0
        %v1585 = vadd.f32 0.0, %v1584
        %v1586 = vpop.f32.mrb[0].mxu0
        %v1587 = vpop.f32.mrb[0].mxu0
        %v1588 = vadd.f32 0.0, %v1587
        %v1589 = vpop.f32.mrb[0].mxu0
        %1590 = vmatprep.mubr.bf16.mxu0 %v1395
        %1591 = vmatmul.mubr.bf16.gmra.mrb[0].mxu0 %v1394
        %v1592 = vpop.f32.mrb[0].mxu0
        %v1593 = vadd.f32 0.0, %v1592
        %v1594 = vpop.f32.mrb[0].mxu0
        %v1595 = vpop.f32.mrb[0].mxu0
        %v1596 = vadd.f32 0.0, %v1595
        %v1597 = vpop.f32.mrb[0].mxu0
        %1598 = vmatprep.mubr.bf16.mxu0 %v1397
        %1599 = vmatmul.mubr.bf16.gmra.mrb[0].mxu0 %v1396
        %v1600 = vpop.f32.mrb[0].mxu0
        %v1601 = vadd.f32 0.0, %v1600
        %v1602 = vpop.f32.mrb[0].mxu0
        %v1603 = vpop.f32.mrb[0].mxu0
        %v1604 = vadd.f32 0.0, %v1603
        %v1605 = vpop.f32.mrb[0].mxu0
        %1606 = vdwg.mxu0
        %v1607 = vld [vmem:[#allocation2] sm:$0xff]
        %v1608 = vld [vmem:[#allocation2 + $0x8] sm:$0xff]
        %v1609 = vld [vmem:[#allocation2 + $0x10] sm:$0xff]
        %v1610 = vld [vmem:[#allocation2 + $0x18] sm:$0xff]
        %v1611 = vld [vmem:[#allocation2 + $0x20] sm:$0xff]
        %v1612 = vld [vmem:[#allocation2 + $0x28] sm:$0xff]
        %v1613 = vld [vmem:[#allocation2 + $0x30] sm:$0xff]
        %v1614 = vld [vmem:[#allocation2 + $0x38] sm:$0xff]
        %v1615 = vld [vmem:[#allocation2 + $0x40] sm:$0xff]
        %v1616 = vld [vmem:[#allocation2 + $0x48] sm:$0xff]
        %v1617 = vld [vmem:[#allocation2 + $0x50] sm:$0xff]
        %v1618 = vld [vmem:[#allocation2 + $0x58] sm:$0xff]
        %v1619 = vld [vmem:[#allocation2 + $0x60] sm:$0xff]
        %v1620 = vld [vmem:[#allocation2 + $0x68] sm:$0xff]
        %v1621 = vld [vmem:[#allocation2 + $0x70] sm:$0xff]
        %v1622 = vld [vmem:[#allocation2 + $0x78] sm:$0xff]
        %v1623 = vadd.f32 %v1607, %v1545
        %v1624 = vadd.f32 %v1608, %v1548
        %v1625 = vadd.f32 %v1609, %v1553
        %v1626 = vadd.f32 %v1610, %v1556
        %v1627 = vadd.f32 %v1611, %v1561
        %v1628 = vadd.f32 %v1612, %v1564
        %v1629 = vadd.f32 %v1613, %v1569
        %v1630 = vadd.f32 %v1614, %v1572
        %v1631 = vadd.f32 %v1615, %v1577
        %v1632 = vadd.f32 %v1616, %v1580
        %v1633 = vadd.f32 %v1617, %v1585
        %v1634 = vadd.f32 %v1618, %v1588
        %v1635 = vadd.f32 %v1619, %v1593
        %v1636 = vadd.f32 %v1620, %v1596
        %v1637 = vadd.f32 %v1621, %v1601
        %v1638 = vadd.f32 %v1622, %v1604
        %1639 = vst [vmem:[#allocation2] sm:$0xff] %v1623
        %1640 = vst [vmem:[#allocation2 + $0x8] sm:$0xff] %v1624
        %1641 = vst [vmem:[#allocation2 + $0x10] sm:$0xff] %v1625
        %1642 = vst [vmem:[#allocation2 + $0x18] sm:$0xff] %v1626
        %1643 = vst [vmem:[#allocation2 + $0x20] sm:$0xff] %v1627
        %1644 = vst [vmem:[#allocation2 + $0x28] sm:$0xff] %v1628
        %1645 = vst [vmem:[#allocation2 + $0x30] sm:$0xff] %v1629
        %1646 = vst [vmem:[#allocation2 + $0x38] sm:$0xff] %v1630
        %1647 = vst [vmem:[#allocation2 + $0x40] sm:$0xff] %v1631
        %1648 = vst [vmem:[#allocation2 + $0x48] sm:$0xff] %v1632
        %1649 = vst [vmem:[#allocation2 + $0x50] sm:$0xff] %v1633
        %1650 = vst [vmem:[#allocation2 + $0x58] sm:$0xff] %v1634
        %1651 = vst [vmem:[#allocation2 + $0x60] sm:$0xff] %v1635
        %1652 = vst [vmem:[#allocation2 + $0x68] sm:$0xff] %v1636
        %1653 = vst [vmem:[#allocation2 + $0x70] sm:$0xff] %v1637
        %1654 = vst [vmem:[#allocation2 + $0x78] sm:$0xff] %v1638
        %s1655 = scalar_lea.vmem %s177, 64 [#allocation3]
        %v1656 = vld [vmem:[%s1655] sm:$0xff]
        %v1657 = vld [vmem:[%s1655 + $0x8] sm:$0xff]
        %v1658 = vld [vmem:[%s1655 + $0x10] sm:$0xff]
        %v1659 = vld [vmem:[%s1655 + $0x18] sm:$0xff]
        %v1660 = vld [vmem:[%s1655 + $0x20] sm:$0xff]
        %v1661 = vld [vmem:[%s1655 + $0x28] sm:$0xff]
        %v1662 = vld [vmem:[%s1655 + $0x30] sm:$0xff]
        %v1663 = vld [vmem:[%s1655 + $0x38] sm:$0xff]
        %v1664 = vld [vmem:[%s1655 + $0x40] sm:$0xff]
        %v1665 = vld [vmem:[%s1655 + $0x48] sm:$0xff]
        %v1666 = vld [vmem:[%s1655 + $0x50] sm:$0xff]
        %v1667 = vld [vmem:[%s1655 + $0x58] sm:$0xff]
        %v1668 = vld [vmem:[%s1655 + $0x60] sm:$0xff]
        %v1669 = vld [vmem:[%s1655 + $0x68] sm:$0xff]
        %v1670 = vld [vmem:[%s1655 + $0x70] sm:$0xff]
        %v1671 = vld [vmem:[%s1655 + $0x78] sm:$0xff]
        %s1672 = scalar_lea.vmem [#allocation6], 512
        %v1673 = vld [vmem:[%s1672] sm:$0xf]
        %v1674 = vld [vmem:[%s1672 + $0x4] sm:$0xf]
        %v1675 = vld [vmem:[%s1672 + $0x8] sm:$0xf]
        %v1676 = vld [vmem:[%s1672 + $0xc] sm:$0xf]
        %v1677 = vld [vmem:[%s1672 + $0x10] sm:$0xf]
        %v1678 = vld [vmem:[%s1672 + $0x14] sm:$0xf]
        %v1679 = vld [vmem:[%s1672 + $0x18] sm:$0xf]
        %v1680 = vld [vmem:[%s1672 + $0x1c] sm:$0xf]
        %v1681 = vld [vmem:[%s1672 + $0x20] sm:$0xf]
        %v1682 = vld [vmem:[%s1672 + $0x24] sm:$0xf]
        %v1683 = vld [vmem:[%s1672 + $0x28] sm:$0xf]
        %v1684 = vld [vmem:[%s1672 + $0x2c] sm:$0xf]
        %v1685 = vld [vmem:[%s1672 + $0x30] sm:$0xf]
        %v1686 = vld [vmem:[%s1672 + $0x34] sm:$0xf]
        %v1687 = vld [vmem:[%s1672 + $0x38] sm:$0xf]
        %v1688 = vld [vmem:[%s1672 + $0x3c] sm:$0xf]
        %v1689 = vld [vmem:[%s1672 + $0x40] sm:$0xf]
        %v1690 = vld [vmem:[%s1672 + $0x44] sm:$0xf]
        %v1691 = vld [vmem:[%s1672 + $0x48] sm:$0xf]
        %v1692 = vld [vmem:[%s1672 + $0x4c] sm:$0xf]
        %v1693 = vld [vmem:[%s1672 + $0x50] sm:$0xf]
        %v1694 = vld [vmem:[%s1672 + $0x54] sm:$0xf]
        %v1695 = vld [vmem:[%s1672 + $0x58] sm:$0xf]
        %v1696 = vld [vmem:[%s1672 + $0x5c] sm:$0xf]
        %v1697 = vld [vmem:[%s1672 + $0x60] sm:$0xf]
        %v1698 = vld [vmem:[%s1672 + $0x64] sm:$0xf]
        %v1699 = vld [vmem:[%s1672 + $0x68] sm:$0xf]
        %v1700 = vld [vmem:[%s1672 + $0x6c] sm:$0xf]
        %v1701 = vld [vmem:[%s1672 + $0x70] sm:$0xf]
        %v1702 = vld [vmem:[%s1672 + $0x74] sm:$0xf]
        %v1703 = vld [vmem:[%s1672 + $0x78] sm:$0xf]
        %v1704 = vld [vmem:[%s1672 + $0x7c] sm:$0xf]
        %v1721 = vunpack.c.l.b16 %v1656
        %v1722 = vunpack.c.h.b16 %v1656
        %v1723 = vunpack.c.l.b16 %v1657
        %v1724 = vunpack.c.h.b16 %v1657
        %v1725 = vunpack.c.l.b16 %v1658
        %v1726 = vunpack.c.h.b16 %v1658
        %v1727 = vunpack.c.l.b16 %v1659
        %v1728 = vunpack.c.h.b16 %v1659
        %v1729 = vunpack.c.l.b16 %v1660
        %v1730 = vunpack.c.h.b16 %v1660
        %v1731 = vunpack.c.l.b16 %v1661
        %v1732 = vunpack.c.h.b16 %v1661
        %v1733 = vunpack.c.l.b16 %v1662
        %v1734 = vunpack.c.h.b16 %v1662
        %v1735 = vunpack.c.l.b16 %v1663
        %v1736 = vunpack.c.h.b16 %v1663
        %v1737 = vunpack.c.l.b16 %v1664
        %v1738 = vunpack.c.h.b16 %v1664
        %v1739 = vunpack.c.l.b16 %v1665
        %v1740 = vunpack.c.h.b16 %v1665
        %v1741 = vunpack.c.l.b16 %v1666
        %v1742 = vunpack.c.h.b16 %v1666
        %v1743 = vunpack.c.l.b16 %v1667
        %v1744 = vunpack.c.h.b16 %v1667
        %v1745 = vunpack.c.l.b16 %v1668
        %v1746 = vunpack.c.h.b16 %v1668
        %v1747 = vunpack.c.l.b16 %v1669
        %v1748 = vunpack.c.h.b16 %v1669
        %v1749 = vunpack.c.l.b16 %v1670
        %v1750 = vunpack.c.h.b16 %v1670
        %v1751 = vunpack.c.l.b16 %v1671
        %v1752 = vunpack.c.h.b16 %v1671
        %v1753 = vpack.c.b16 %v1723, %v1721
        %v1754 = vpack.c.b16 %v1724, %v1722
        %v1755 = vpack.c.b16 %v1727, %v1725
        %v1756 = vpack.c.b16 %v1728, %v1726
        %v1757 = vpack.c.b16 %v1731, %v1729
        %v1758 = vpack.c.b16 %v1732, %v1730
        %v1759 = vpack.c.b16 %v1735, %v1733
        %v1760 = vpack.c.b16 %v1736, %v1734
        %v1761 = vpack.c.b16 %v1739, %v1737
        %v1762 = vpack.c.b16 %v1740, %v1738
        %v1763 = vpack.c.b16 %v1743, %v1741
        %v1764 = vpack.c.b16 %v1744, %v1742
        %v1765 = vpack.c.b16 %v1747, %v1745
        %v1766 = vpack.c.b16 %v1748, %v1746
        %v1767 = vpack.c.b16 %v1751, %v1749
        %v1768 = vpack.c.b16 %v1752, %v1750
        %v1817 = vunpack.c.l.b16 %v1673
        %v1818 = vunpack.c.l.b16 %v1674
        %v1819 = vunpack.c.l.b16 %v1675
        %v1820 = vunpack.c.l.b16 %v1676
        %v1821 = vunpack.c.l.b16 %v1677
        %v1822 = vunpack.c.l.b16 %v1678
        %v1823 = vunpack.c.l.b16 %v1679
        %v1824 = vunpack.c.l.b16 %v1680
        %v1825 = vunpack.c.l.b16 %v1681
        %v1826 = vunpack.c.l.b16 %v1682
        %v1827 = vunpack.c.l.b16 %v1683
        %v1828 = vunpack.c.l.b16 %v1684
        %v1829 = vunpack.c.l.b16 %v1685
        %v1830 = vunpack.c.l.b16 %v1686
        %v1831 = vunpack.c.l.b16 %v1687
        %v1832 = vunpack.c.l.b16 %v1688
        %v1833 = vunpack.c.l.b16 %v1689
        %v1834 = vunpack.c.l.b16 %v1690
        %v1835 = vunpack.c.l.b16 %v1691
        %v1836 = vunpack.c.l.b16 %v1692
        %v1837 = vunpack.c.l.b16 %v1693
        %v1838 = vunpack.c.l.b16 %v1694
        %v1839 = vunpack.c.l.b16 %v1695
        %v1840 = vunpack.c.l.b16 %v1696
        %v1841 = vunpack.c.l.b16 %v1697
        %v1842 = vunpack.c.l.b16 %v1698
        %v1843 = vunpack.c.l.b16 %v1699
        %v1844 = vunpack.c.l.b16 %v1700
        %v1845 = vunpack.c.l.b16 %v1701
        %v1846 = vunpack.c.l.b16 %v1702
        %v1847 = vunpack.c.l.b16 %v1703
        %v1848 = vunpack.c.l.b16 %v1704
        %v1849 = vpack.c.b16 %v1818, %v1817
        %v1850 = vpack.c.b16 %v1820, %v1819
        %v1851 = vpack.c.b16 %v1822, %v1821
        %v1852 = vpack.c.b16 %v1824, %v1823
        %v1853 = vpack.c.b16 %v1826, %v1825
        %v1854 = vpack.c.b16 %v1828, %v1827
        %v1855 = vpack.c.b16 %v1830, %v1829
        %v1856 = vpack.c.b16 %v1832, %v1831
        %v1857 = vpack.c.b16 %v1834, %v1833
        %v1858 = vpack.c.b16 %v1836, %v1835
        %v1859 = vpack.c.b16 %v1838, %v1837
        %v1860 = vpack.c.b16 %v1840, %v1839
        %v1861 = vpack.c.b16 %v1842, %v1841
        %v1862 = vpack.c.b16 %v1844, %v1843
        %v1863 = vpack.c.b16 %v1846, %v1845
        %v1864 = vpack.c.b16 %v1848, %v1847
        %1881 = vmatprep.subr.bf16.mxu0 0
        %1882 = vmatpush1.bf16.msra.mxu0 %v1849
        %1883 = vmatprep.subr.bf16.mxu0 0
        %1884 = vmatpush1.bf16.msra.mxu0 %v1850
        %1885 = vmatprep.subr.bf16.mxu0 0
        %1886 = vmatpush1.bf16.msra.mxu0 %v1851
        %1887 = vmatprep.subr.bf16.mxu0 0
        %1888 = vmatpush1.bf16.msra.mxu0 %v1852
        %1889 = vmatprep.subr.bf16.mxu0 0
        %1890 = vmatpush1.bf16.msra.mxu0 %v1853
        %1891 = vmatprep.subr.bf16.mxu0 0
        %1892 = vmatpush1.bf16.msra.mxu0 %v1854
        %1893 = vmatprep.subr.bf16.mxu0 0
        %1894 = vmatpush1.bf16.msra.mxu0 %v1855
        %1895 = vmatprep.subr.bf16.mxu0 0
        %1896 = vmatpush1.bf16.msra.mxu0 %v1856
        %1897 = vmatprep.subr.bf16.mxu0 0
        %1898 = vmatpush1.bf16.msra.mxu0 %v1857
        %1899 = vmatprep.subr.bf16.mxu0 0
        %1900 = vmatpush1.bf16.msra.mxu0 %v1858
        %1901 = vmatprep.subr.bf16.mxu0 0
        %1902 = vmatpush1.bf16.msra.mxu0 %v1859
        %1903 = vmatprep.subr.bf16.mxu0 0
        %1904 = vmatpush1.bf16.msra.mxu0 %v1860
        %1905 = vmatprep.subr.bf16.mxu0 0
        %1906 = vmatpush1.bf16.msra.mxu0 %v1861
        %1907 = vmatprep.subr.bf16.mxu0 0
        %1908 = vmatpush1.bf16.msra.mxu0 %v1862
        %1909 = vmatprep.subr.bf16.mxu0 0
        %1910 = vmatpush1.bf16.msra.mxu0 %v1863
        %1911 = vmatprep.subr.bf16.mxu0 0
        %1912 = vmatpush1.bf16.msra.mxu0 %v1864
        %1913 = vmatprep.mubr.bf16.mxu0 %v1754
        %1914 = vmatmul.mubr.bf16.gmra.mrb[0].mxu0 %v1753
        %v1915 = vpop.f32.mrb[0].mxu0
        %v1916 = vadd.f32 0.0, %v1915
        %v1917 = vpop.f32.mrb[0].mxu0
        %v1918 = vpop.f32.mrb[0].mxu0
        %v1919 = vadd.f32 0.0, %v1918
        %v1920 = vpop.f32.mrb[0].mxu0
        %1921 = vmatprep.mubr.bf16.mxu0 %v1756
        %1922 = vmatmul.mubr.bf16.gmra.mrb[0].mxu0 %v1755
        %v1923 = vpop.f32.mrb[0].mxu0
        %v1924 = vadd.f32 0.0, %v1923
        %v1925 = vpop.f32.mrb[0].mxu0
        %v1926 = vpop.f32.mrb[0].mxu0
        %v1927 = vadd.f32 0.0, %v1926
        %v1928 = vpop.f32.mrb[0].mxu0
        %1929 = vmatprep.mubr.bf16.mxu0 %v1758
        %1930 = vmatmul.mubr.bf16.gmra.mrb[0].mxu0 %v1757
        %v1931 = vpop.f32.mrb[0].mxu0
        %v1932 = vadd.f32 0.0, %v1931
        %v1933 = vpop.f32.mrb[0].mxu0
        %v1934 = vpop.f32.mrb[0].mxu0
        %v1935 = vadd.f32 0.0, %v1934
        %v1936 = vpop.f32.mrb[0].mxu0
        %1937 = vmatprep.mubr.bf16.mxu0 %v1760
        %1938 = vmatmul.mubr.bf16.gmra.mrb[0].mxu0 %v1759
        %v1939 = vpop.f32.mrb[0].mxu0
        %v1940 = vadd.f32 0.0, %v1939
        %v1941 = vpop.f32.mrb[0].mxu0
        %v1942 = vpop.f32.mrb[0].mxu0
        %v1943 = vadd.f32 0.0, %v1942
        %v1944 = vpop.f32.mrb[0].mxu0
        %1945 = vmatprep.mubr.bf16.mxu0 %v1762
        %1946 = vmatmul.mubr.bf16.gmra.mrb[0].mxu0 %v1761
        %v1947 = vpop.f32.mrb[0].mxu0
        %v1948 = vadd.f32 0.0, %v1947
        %v1949 = vpop.f32.mrb[0].mxu0
        %v1950 = vpop.f32.mrb[0].mxu0
        %v1951 = vadd.f32 0.0, %v1950
        %v1952 = vpop.f32.mrb[0].mxu0
        %1953 = vmatprep.mubr.bf16.mxu0 %v1764
        %1954 = vmatmul.mubr.bf16.gmra.mrb[0].mxu0 %v1763
        %v1955 = vpop.f32.mrb[0].mxu0
        %v1956 = vadd.f32 0.0, %v1955
        %v1957 = vpop.f32.mrb[0].mxu0
        %v1958 = vpop.f32.mrb[0].mxu0
        %v1959 = vadd.f32 0.0, %v1958
        %v1960 = vpop.f32.mrb[0].mxu0
        %1961 = vmatprep.mubr.bf16.mxu0 %v1766
        %1962 = vmatmul.mubr.bf16.gmra.mrb[0].mxu0 %v1765
        %v1963 = vpop.f32.mrb[0].mxu0
        %v1964 = vadd.f32 0.0, %v1963
        %v1965 = vpop.f32.mrb[0].mxu0
        %v1966 = vpop.f32.mrb[0].mxu0
        %v1967 = vadd.f32 0.0, %v1966
        %v1968 = vpop.f32.mrb[0].mxu0
        %1969 = vmatprep.mubr.bf16.mxu0 %v1768
        %1970 = vmatmul.mubr.bf16.gmra.mrb[0].mxu0 %v1767
        %v1971 = vpop.f32.mrb[0].mxu0
        %v1972 = vadd.f32 0.0, %v1971
        %v1973 = vpop.f32.mrb[0].mxu0
        %v1974 = vpop.f32.mrb[0].mxu0
        %v1975 = vadd.f32 0.0, %v1974
        %v1976 = vpop.f32.mrb[0].mxu0
        %1977 = vdwg.mxu0
        %v1978 = vld [vmem:[#allocation2] sm:$0xff]
        %v1979 = vld [vmem:[#allocation2 + $0x8] sm:$0xff]
        %v1980 = vld [vmem:[#allocation2 + $0x10] sm:$0xff]
        %v1981 = vld [vmem:[#allocation2 + $0x18] sm:$0xff]
        %v1982 = vld [vmem:[#allocation2 + $0x20] sm:$0xff]
        %v1983 = vld [vmem:[#allocation2 + $0x28] sm:$0xff]
        %v1984 = vld [vmem:[#allocation2 + $0x30] sm:$0xff]
        %v1985 = vld [vmem:[#allocation2 + $0x38] sm:$0xff]
        %v1986 = vld [vmem:[#allocation2 + $0x40] sm:$0xff]
        %v1987 = vld [vmem:[#allocation2 + $0x48] sm:$0xff]
        %v1988 = vld [vmem:[#allocation2 + $0x50] sm:$0xff]
        %v1989 = vld [vmem:[#allocation2 + $0x58] sm:$0xff]
        %v1990 = vld [vmem:[#allocation2 + $0x60] sm:$0xff]
        %v1991 = vld [vmem:[#allocation2 + $0x68] sm:$0xff]
        %v1992 = vld [vmem:[#allocation2 + $0x70] sm:$0xff]
        %v1993 = vld [vmem:[#allocation2 + $0x78] sm:$0xff]
        %v1994 = vadd.f32 %v1978, %v1916
        %v1995 = vadd.f32 %v1979, %v1919
        %v1996 = vadd.f32 %v1980, %v1924
        %v1997 = vadd.f32 %v1981, %v1927
        %v1998 = vadd.f32 %v1982, %v1932
        %v1999 = vadd.f32 %v1983, %v1935
        %v2000 = vadd.f32 %v1984, %v1940
        %v2001 = vadd.f32 %v1985, %v1943
        %v2002 = vadd.f32 %v1986, %v1948
        %v2003 = vadd.f32 %v1987, %v1951
        %v2004 = vadd.f32 %v1988, %v1956
        %v2005 = vadd.f32 %v1989, %v1959
        %v2006 = vadd.f32 %v1990, %v1964
        %v2007 = vadd.f32 %v1991, %v1967
        %v2008 = vadd.f32 %v1992, %v1972
        %v2009 = vadd.f32 %v1993, %v1975
        %2010 = vst [vmem:[#allocation2] sm:$0xff] %v1994
        %2011 = vst [vmem:[#allocation2 + $0x8] sm:$0xff] %v1995
        %2012 = vst [vmem:[#allocation2 + $0x10] sm:$0xff] %v1996
        %2013 = vst [vmem:[#allocation2 + $0x18] sm:$0xff] %v1997
        %2014 = vst [vmem:[#allocation2 + $0x20] sm:$0xff] %v1998
        %2015 = vst [vmem:[#allocation2 + $0x28] sm:$0xff] %v1999
        %2016 = vst [vmem:[#allocation2 + $0x30] sm:$0xff] %v2000
        %2017 = vst [vmem:[#allocation2 + $0x38] sm:$0xff] %v2001
        %2018 = vst [vmem:[#allocation2 + $0x40] sm:$0xff] %v2002
        %2019 = vst [vmem:[#allocation2 + $0x48] sm:$0xff] %v2003
        %2020 = vst [vmem:[#allocation2 + $0x50] sm:$0xff] %v2004
        %2021 = vst [vmem:[#allocation2 + $0x58] sm:$0xff] %v2005
        %2022 = vst [vmem:[#allocation2 + $0x60] sm:$0xff] %v2006
        %2023 = vst [vmem:[#allocation2 + $0x68] sm:$0xff] %v2007
        %2024 = vst [vmem:[#allocation2 + $0x70] sm:$0xff] %v2008
        %2025 = vst [vmem:[#allocation2 + $0x78] sm:$0xff] %v2009
        %s2026 = scalar_lea.vmem %s177, 80 [#allocation3]
        %v2027 = vld [vmem:[%s2026] sm:$0xff]
        %v2028 = vld [vmem:[%s2026 + $0x8] sm:$0xff]
        %v2029 = vld [vmem:[%s2026 + $0x10] sm:$0xff]
        %v2030 = vld [vmem:[%s2026 + $0x18] sm:$0xff]
        %v2031 = vld [vmem:[%s2026 + $0x20] sm:$0xff]
        %v2032 = vld [vmem:[%s2026 + $0x28] sm:$0xff]
        %v2033 = vld [vmem:[%s2026 + $0x30] sm:$0xff]
        %v2034 = vld [vmem:[%s2026 + $0x38] sm:$0xff]
        %v2035 = vld [vmem:[%s2026 + $0x40] sm:$0xff]
        %v2036 = vld [vmem:[%s2026 + $0x48] sm:$0xff]
        %v2037 = vld [vmem:[%s2026 + $0x50] sm:$0xff]
        %v2038 = vld [vmem:[%s2026 + $0x58] sm:$0xff]
        %v2039 = vld [vmem:[%s2026 + $0x60] sm:$0xff]
        %v2040 = vld [vmem:[%s2026 + $0x68] sm:$0xff]
        %v2041 = vld [vmem:[%s2026 + $0x70] sm:$0xff]
        %v2042 = vld [vmem:[%s2026 + $0x78] sm:$0xff]
        %s2043 = scalar_lea.vmem [#allocation6], 640
        %v2044 = vld [vmem:[%s2043] sm:$0xf]
        %v2045 = vld [vmem:[%s2043 + $0x4] sm:$0xf]
        %v2046 = vld [vmem:[%s2043 + $0x8] sm:$0xf]
        %v2047 = vld [vmem:[%s2043 + $0xc] sm:$0xf]
        %v2048 = vld [vmem:[%s2043 + $0x10] sm:$0xf]
        %v2049 = vld [vmem:[%s2043 + $0x14] sm:$0xf]
        %v2050 = vld [vmem:[%s2043 + $0x18] sm:$0xf]
        %v2051 = vld [vmem:[%s2043 + $0x1c] sm:$0xf]
        %v2052 = vld [vmem:[%s2043 + $0x20] sm:$0xf]
        %v2053 = vld [vmem:[%s2043 + $0x24] sm:$0xf]
        %v2054 = vld [vmem:[%s2043 + $0x28] sm:$0xf]
        %v2055 = vld [vmem:[%s2043 + $0x2c] sm:$0xf]
        %v2056 = vld [vmem:[%s2043 + $0x30] sm:$0xf]
        %v2057 = vld [vmem:[%s2043 + $0x34] sm:$0xf]
        %v2058 = vld [vmem:[%s2043 + $0x38] sm:$0xf]
        %v2059 = vld [vmem:[%s2043 + $0x3c] sm:$0xf]
        %v2060 = vld [vmem:[%s2043 + $0x40] sm:$0xf]
        %v2061 = vld [vmem:[%s2043 + $0x44] sm:$0xf]
        %v2062 = vld [vmem:[%s2043 + $0x48] sm:$0xf]
        %v2063 = vld [vmem:[%s2043 + $0x4c] sm:$0xf]
        %v2064 = vld [vmem:[%s2043 + $0x50] sm:$0xf]
        %v2065 = vld [vmem:[%s2043 + $0x54] sm:$0xf]
        %v2066 = vld [vmem:[%s2043 + $0x58] sm:$0xf]
        %v2067 = vld [vmem:[%s2043 + $0x5c] sm:$0xf]
        %v2068 = vld [vmem:[%s2043 + $0x60] sm:$0xf]
        %v2069 = vld [vmem:[%s2043 + $0x64] sm:$0xf]
        %v2070 = vld [vmem:[%s2043 + $0x68] sm:$0xf]
        %v2071 = vld [vmem:[%s2043 + $0x6c] sm:$0xf]
        %v2072 = vld [vmem:[%s2043 + $0x70] sm:$0xf]
        %v2073 = vld [vmem:[%s2043 + $0x74] sm:$0xf]
        %v2074 = vld [vmem:[%s2043 + $0x78] sm:$0xf]
        %v2075 = vld [vmem:[%s2043 + $0x7c] sm:$0xf]
        %v2092 = vunpack.c.l.b16 %v2027
        %v2093 = vunpack.c.h.b16 %v2027
        %v2094 = vunpack.c.l.b16 %v2028
        %v2095 = vunpack.c.h.b16 %v2028
        %v2096 = vunpack.c.l.b16 %v2029
        %v2097 = vunpack.c.h.b16 %v2029
        %v2098 = vunpack.c.l.b16 %v2030
        %v2099 = vunpack.c.h.b16 %v2030
        %v2100 = vunpack.c.l.b16 %v2031
        %v2101 = vunpack.c.h.b16 %v2031
        %v2102 = vunpack.c.l.b16 %v2032
        %v2103 = vunpack.c.h.b16 %v2032
        %v2104 = vunpack.c.l.b16 %v2033
        %v2105 = vunpack.c.h.b16 %v2033
        %v2106 = vunpack.c.l.b16 %v2034
        %v2107 = vunpack.c.h.b16 %v2034
        %v2108 = vunpack.c.l.b16 %v2035
        %v2109 = vunpack.c.h.b16 %v2035
        %v2110 = vunpack.c.l.b16 %v2036
        %v2111 = vunpack.c.h.b16 %v2036
        %v2112 = vunpack.c.l.b16 %v2037
        %v2113 = vunpack.c.h.b16 %v2037
        %v2114 = vunpack.c.l.b16 %v2038
        %v2115 = vunpack.c.h.b16 %v2038
        %v2116 = vunpack.c.l.b16 %v2039
        %v2117 = vunpack.c.h.b16 %v2039
        %v2118 = vunpack.c.l.b16 %v2040
        %v2119 = vunpack.c.h.b16 %v2040
        %v2120 = vunpack.c.l.b16 %v2041
        %v2121 = vunpack.c.h.b16 %v2041
        %v2122 = vunpack.c.l.b16 %v2042
        %v2123 = vunpack.c.h.b16 %v2042
        %v2124 = vpack.c.b16 %v2094, %v2092
        %v2125 = vpack.c.b16 %v2095, %v2093
        %v2126 = vpack.c.b16 %v2098, %v2096
        %v2127 = vpack.c.b16 %v2099, %v2097
        %v2128 = vpack.c.b16 %v2102, %v2100
        %v2129 = vpack.c.b16 %v2103, %v2101
        %v2130 = vpack.c.b16 %v2106, %v2104
        %v2131 = vpack.c.b16 %v2107, %v2105
        %v2132 = vpack.c.b16 %v2110, %v2108
        %v2133 = vpack.c.b16 %v2111, %v2109
        %v2134 = vpack.c.b16 %v2114, %v2112
        %v2135 = vpack.c.b16 %v2115, %v2113
        %v2136 = vpack.c.b16 %v2118, %v2116
        %v2137 = vpack.c.b16 %v2119, %v2117
        %v2138 = vpack.c.b16 %v2122, %v2120
        %v2139 = vpack.c.b16 %v2123, %v2121
        %v2188 = vunpack.c.l.b16 %v2044
        %v2189 = vunpack.c.l.b16 %v2045
        %v2190 = vunpack.c.l.b16 %v2046
        %v2191 = vunpack.c.l.b16 %v2047
        %v2192 = vunpack.c.l.b16 %v2048
        %v2193 = vunpack.c.l.b16 %v2049
        %v2194 = vunpack.c.l.b16 %v2050
        %v2195 = vunpack.c.l.b16 %v2051
        %v2196 = vunpack.c.l.b16 %v2052
        %v2197 = vunpack.c.l.b16 %v2053
        %v2198 = vunpack.c.l.b16 %v2054
        %v2199 = vunpack.c.l.b16 %v2055
        %v2200 = vunpack.c.l.b16 %v2056
        %v2201 = vunpack.c.l.b16 %v2057
        %v2202 = vunpack.c.l.b16 %v2058
        %v2203 = vunpack.c.l.b16 %v2059
        %v2204 = vunpack.c.l.b16 %v2060
        %v2205 = vunpack.c.l.b16 %v2061
        %v2206 = vunpack.c.l.b16 %v2062
        %v2207 = vunpack.c.l.b16 %v2063
        %v2208 = vunpack.c.l.b16 %v2064
        %v2209 = vunpack.c.l.b16 %v2065
        %v2210 = vunpack.c.l.b16 %v2066
        %v2211 = vunpack.c.l.b16 %v2067
        %v2212 = vunpack.c.l.b16 %v2068
        %v2213 = vunpack.c.l.b16 %v2069
        %v2214 = vunpack.c.l.b16 %v2070
        %v2215 = vunpack.c.l.b16 %v2071
        %v2216 = vunpack.c.l.b16 %v2072
        %v2217 = vunpack.c.l.b16 %v2073
        %v2218 = vunpack.c.l.b16 %v2074
        %v2219 = vunpack.c.l.b16 %v2075
        %v2220 = vpack.c.b16 %v2189, %v2188
        %v2221 = vpack.c.b16 %v2191, %v2190
        %v2222 = vpack.c.b16 %v2193, %v2192
        %v2223 = vpack.c.b16 %v2195, %v2194
        %v2224 = vpack.c.b16 %v2197, %v2196
        %v2225 = vpack.c.b16 %v2199, %v2198
        %v2226 = vpack.c.b16 %v2201, %v2200
        %v2227 = vpack.c.b16 %v2203, %v2202
        %v2228 = vpack.c.b16 %v2205, %v2204
        %v2229 = vpack.c.b16 %v2207, %v2206
        %v2230 = vpack.c.b16 %v2209, %v2208
        %v2231 = vpack.c.b16 %v2211, %v2210
        %v2232 = vpack.c.b16 %v2213, %v2212
        %v2233 = vpack.c.b16 %v2215, %v2214
        %v2234 = vpack.c.b16 %v2217, %v2216
        %v2235 = vpack.c.b16 %v2219, %v2218
        %2252 = vmatprep.subr.bf16.mxu0 0
        %2253 = vmatpush1.bf16.msra.mxu0 %v2220
        %2254 = vmatprep.subr.bf16.mxu0 0
        %2255 = vmatpush1.bf16.msra.mxu0 %v2221
        %2256 = vmatprep.subr.bf16.mxu0 0
        %2257 = vmatpush1.bf16.msra.mxu0 %v2222
        %2258 = vmatprep.subr.bf16.mxu0 0
        %2259 = vmatpush1.bf16.msra.mxu0 %v2223
        %2260 = vmatprep.subr.bf16.mxu0 0
        %2261 = vmatpush1.bf16.msra.mxu0 %v2224
        %2262 = vmatprep.subr.bf16.mxu0 0
        %2263 = vmatpush1.bf16.msra.mxu0 %v2225
        %2264 = vmatprep.subr.bf16.mxu0 0
        %2265 = vmatpush1.bf16.msra.mxu0 %v2226
        %2266 = vmatprep.subr.bf16.mxu0 0
        %2267 = vmatpush1.bf16.msra.mxu0 %v2227
        %2268 = vmatprep.subr.bf16.mxu0 0
        %2269 = vmatpush1.bf16.msra.mxu0 %v2228
        %2270 = vmatprep.subr.bf16.mxu0 0
        %2271 = vmatpush1.bf16.msra.mxu0 %v2229
        %2272 = vmatprep.subr.bf16.mxu0 0
        %2273 = vmatpush1.bf16.msra.mxu0 %v2230
        %2274 = vmatprep.subr.bf16.mxu0 0
        %2275 = vmatpush1.bf16.msra.mxu0 %v2231
        %2276 = vmatprep.subr.bf16.mxu0 0
        %2277 = vmatpush1.bf16.msra.mxu0 %v2232
        %2278 = vmatprep.subr.bf16.mxu0 0
        %2279 = vmatpush1.bf16.msra.mxu0 %v2233
        %2280 = vmatprep.subr.bf16.mxu0 0
        %2281 = vmatpush1.bf16.msra.mxu0 %v2234
        %2282 = vmatprep.subr.bf16.mxu0 0
        %2283 = vmatpush1.bf16.msra.mxu0 %v2235
        %2284 = vmatprep.mubr.bf16.mxu0 %v2125
        %2285 = vmatmul.mubr.bf16.gmra.mrb[0].mxu0 %v2124
        %v2286 = vpop.f32.mrb[0].mxu0
        %v2287 = vadd.f32 0.0, %v2286
        %v2288 = vpop.f32.mrb[0].mxu0
        %v2289 = vpop.f32.mrb[0].mxu0
        %v2290 = vadd.f32 0.0, %v2289
        %v2291 = vpop.f32.mrb[0].mxu0
        %2292 = vmatprep.mubr.bf16.mxu0 %v2127
        %2293 = vmatmul.mubr.bf16.gmra.mrb[0].mxu0 %v2126
        %v2294 = vpop.f32.mrb[0].mxu0
        %v2295 = vadd.f32 0.0, %v2294
        %v2296 = vpop.f32.mrb[0].mxu0
        %v2297 = vpop.f32.mrb[0].mxu0
        %v2298 = vadd.f32 0.0, %v2297
        %v2299 = vpop.f32.mrb[0].mxu0
        %2300 = vmatprep.mubr.bf16.mxu0 %v2129
        %2301 = vmatmul.mubr.bf16.gmra.mrb[0].mxu0 %v2128
        %v2302 = vpop.f32.mrb[0].mxu0
        %v2303 = vadd.f32 0.0, %v2302
        %v2304 = vpop.f32.mrb[0].mxu0
        %v2305 = vpop.f32.mrb[0].mxu0
        %v2306 = vadd.f32 0.0, %v2305
        %v2307 = vpop.f32.mrb[0].mxu0
        %2308 = vmatprep.mubr.bf16.mxu0 %v2131
        %2309 = vmatmul.mubr.bf16.gmra.mrb[0].mxu0 %v2130
        %v2310 = vpop.f32.mrb[0].mxu0
        %v2311 = vadd.f32 0.0, %v2310
        %v2312 = vpop.f32.mrb[0].mxu0
        %v2313 = vpop.f32.mrb[0].mxu0
        %v2314 = vadd.f32 0.0, %v2313
        %v2315 = vpop.f32.mrb[0].mxu0
        %2316 = vmatprep.mubr.bf16.mxu0 %v2133
        %2317 = vmatmul.mubr.bf16.gmra.mrb[0].mxu0 %v2132
        %v2318 = vpop.f32.mrb[0].mxu0
        %v2319 = vadd.f32 0.0, %v2318
        %v2320 = vpop.f32.mrb[0].mxu0
        %v2321 = vpop.f32.mrb[0].mxu0
        %v2322 = vadd.f32 0.0, %v2321
        %v2323 = vpop.f32.mrb[0].mxu0
        %2324 = vmatprep.mubr.bf16.mxu0 %v2135
        %2325 = vmatmul.mubr.bf16.gmra.mrb[0].mxu0 %v2134
        %v2326 = vpop.f32.mrb[0].mxu0
        %v2327 = vadd.f32 0.0, %v2326
        %v2328 = vpop.f32.mrb[0].mxu0
        %v2329 = vpop.f32.mrb[0].mxu0
        %v2330 = vadd.f32 0.0, %v2329
        %v2331 = vpop.f32.mrb[0].mxu0
        %2332 = vmatprep.mubr.bf16.mxu0 %v2137
        %2333 = vmatmul.mubr.bf16.gmra.mrb[0].mxu0 %v2136
        %v2334 = vpop.f32.mrb[0].mxu0
        %v2335 = vadd.f32 0.0, %v2334
        %v2336 = vpop.f32.mrb[0].mxu0
        %v2337 = vpop.f32.mrb[0].mxu0
        %v2338 = vadd.f32 0.0, %v2337
        %v2339 = vpop.f32.mrb[0].mxu0
        %2340 = vmatprep.mubr.bf16.mxu0 %v2139
        %2341 = vmatmul.mubr.bf16.gmra.mrb[0].mxu0 %v2138
        %v2342 = vpop.f32.mrb[0].mxu0
        %v2343 = vadd.f32 0.0, %v2342
        %v2344 = vpop.f32.mrb[0].mxu0
        %v2345 = vpop.f32.mrb[0].mxu0
        %v2346 = vadd.f32 0.0, %v2345
        %v2347 = vpop.f32.mrb[0].mxu0
        %2348 = vdwg.mxu0
        %v2349 = vld [vmem:[#allocation2] sm:$0xff]
        %v2350 = vld [vmem:[#allocation2 + $0x8] sm:$0xff]
        %v2351 = vld [vmem:[#allocation2 + $0x10] sm:$0xff]
        %v2352 = vld [vmem:[#allocation2 + $0x18] sm:$0xff]
        %v2353 = vld [vmem:[#allocation2 + $0x20] sm:$0xff]
        %v2354 = vld [vmem:[#allocation2 + $0x28] sm:$0xff]
        %v2355 = vld [vmem:[#allocation2 + $0x30] sm:$0xff]
        %v2356 = vld [vmem:[#allocation2 + $0x38] sm:$0xff]
        %v2357 = vld [vmem:[#allocation2 + $0x40] sm:$0xff]
        %v2358 = vld [vmem:[#allocation2 + $0x48] sm:$0xff]
        %v2359 = vld [vmem:[#allocation2 + $0x50] sm:$0xff]
        %v2360 = vld [vmem:[#allocation2 + $0x58] sm:$0xff]
        %v2361 = vld [vmem:[#allocation2 + $0x60] sm:$0xff]
        %v2362 = vld [vmem:[#allocation2 + $0x68] sm:$0xff]
        %v2363 = vld [vmem:[#allocation2 + $0x70] sm:$0xff]
        %v2364 = vld [vmem:[#allocation2 + $0x78] sm:$0xff]
        %v2365 = vadd.f32 %v2349, %v2287
        %v2366 = vadd.f32 %v2350, %v2290
        %v2367 = vadd.f32 %v2351, %v2295
        %v2368 = vadd.f32 %v2352, %v2298
        %v2369 = vadd.f32 %v2353, %v2303
        %v2370 = vadd.f32 %v2354, %v2306
        %v2371 = vadd.f32 %v2355, %v2311
        %v2372 = vadd.f32 %v2356, %v2314
        %v2373 = vadd.f32 %v2357, %v2319
        %v2374 = vadd.f32 %v2358, %v2322
        %v2375 = vadd.f32 %v2359, %v2327
        %v2376 = vadd.f32 %v2360, %v2330
        %v2377 = vadd.f32 %v2361, %v2335
        %v2378 = vadd.f32 %v2362, %v2338
        %v2379 = vadd.f32 %v2363, %v2343
        %v2380 = vadd.f32 %v2364, %v2346
        %2381 = vst [vmem:[#allocation2] sm:$0xff] %v2365
        %2382 = vst [vmem:[#allocation2 + $0x8] sm:$0xff] %v2366
        %2383 = vst [vmem:[#allocation2 + $0x10] sm:$0xff] %v2367
        %2384 = vst [vmem:[#allocation2 + $0x18] sm:$0xff] %v2368
        %2385 = vst [vmem:[#allocation2 + $0x20] sm:$0xff] %v2369
        %2386 = vst [vmem:[#allocation2 + $0x28] sm:$0xff] %v2370
        %2387 = vst [vmem:[#allocation2 + $0x30] sm:$0xff] %v2371
        %2388 = vst [vmem:[#allocation2 + $0x38] sm:$0xff] %v2372
        %2389 = vst [vmem:[#allocation2 + $0x40] sm:$0xff] %v2373
        %2390 = vst [vmem:[#allocation2 + $0x48] sm:$0xff] %v2374
        %2391 = vst [vmem:[#allocation2 + $0x50] sm:$0xff] %v2375
        %2392 = vst [vmem:[#allocation2 + $0x58] sm:$0xff] %v2376
        %2393 = vst [vmem:[#allocation2 + $0x60] sm:$0xff] %v2377
        %2394 = vst [vmem:[#allocation2 + $0x68] sm:$0xff] %v2378
        %2395 = vst [vmem:[#allocation2 + $0x70] sm:$0xff] %v2379
        %2396 = vst [vmem:[#allocation2 + $0x78] sm:$0xff] %v2380
        %s2397 = scalar_lea.vmem %s177, 96 [#allocation3]
        %v2398 = vld [vmem:[%s2397] sm:$0xff]
        %v2399 = vld [vmem:[%s2397 + $0x8] sm:$0xff]
        %v2400 = vld [vmem:[%s2397 + $0x10] sm:$0xff]
        %v2401 = vld [vmem:[%s2397 + $0x18] sm:$0xff]
        %v2402 = vld [vmem:[%s2397 + $0x20] sm:$0xff]
        %v2403 = vld [vmem:[%s2397 + $0x28] sm:$0xff]
        %v2404 = vld [vmem:[%s2397 + $0x30] sm:$0xff]
        %v2405 = vld [vmem:[%s2397 + $0x38] sm:$0xff]
        %v2406 = vld [vmem:[%s2397 + $0x40] sm:$0xff]
        %v2407 = vld [vmem:[%s2397 + $0x48] sm:$0xff]
        %v2408 = vld [vmem:[%s2397 + $0x50] sm:$0xff]
        %v2409 = vld [vmem:[%s2397 + $0x58] sm:$0xff]
        %v2410 = vld [vmem:[%s2397 + $0x60] sm:$0xff]
        %v2411 = vld [vmem:[%s2397 + $0x68] sm:$0xff]
        %v2412 = vld [vmem:[%s2397 + $0x70] sm:$0xff]
        %v2413 = vld [vmem:[%s2397 + $0x78] sm:$0xff]
        %s2414 = scalar_lea.vmem [#allocation6], 768
        %v2415 = vld [vmem:[%s2414] sm:$0xf]
        %v2416 = vld [vmem:[%s2414 + $0x4] sm:$0xf]
        %v2417 = vld [vmem:[%s2414 + $0x8] sm:$0xf]
        %v2418 = vld [vmem:[%s2414 + $0xc] sm:$0xf]
        %v2419 = vld [vmem:[%s2414 + $0x10] sm:$0xf]
        %v2420 = vld [vmem:[%s2414 + $0x14] sm:$0xf]
        %v2421 = vld [vmem:[%s2414 + $0x18] sm:$0xf]
        %v2422 = vld [vmem:[%s2414 + $0x1c] sm:$0xf]
        %v2423 = vld [vmem:[%s2414 + $0x20] sm:$0xf]
        %v2424 = vld [vmem:[%s2414 + $0x24] sm:$0xf]
        %v2425 = vld [vmem:[%s2414 + $0x28] sm:$0xf]
        %v2426 = vld [vmem:[%s2414 + $0x2c] sm:$0xf]
        %v2427 = vld [vmem:[%s2414 + $0x30] sm:$0xf]
        %v2428 = vld [vmem:[%s2414 + $0x34] sm:$0xf]
        %v2429 = vld [vmem:[%s2414 + $0x38] sm:$0xf]
        %v2430 = vld [vmem:[%s2414 + $0x3c] sm:$0xf]
        %v2431 = vld [vmem:[%s2414 + $0x40] sm:$0xf]
        %v2432 = vld [vmem:[%s2414 + $0x44] sm:$0xf]
        %v2433 = vld [vmem:[%s2414 + $0x48] sm:$0xf]
        %v2434 = vld [vmem:[%s2414 + $0x4c] sm:$0xf]
        %v2435 = vld [vmem:[%s2414 + $0x50] sm:$0xf]
        %v2436 = vld [vmem:[%s2414 + $0x54] sm:$0xf]
        %v2437 = vld [vmem:[%s2414 + $0x58] sm:$0xf]
        %v2438 = vld [vmem:[%s2414 + $0x5c] sm:$0xf]
        %v2439 = vld [vmem:[%s2414 + $0x60] sm:$0xf]
        %v2440 = vld [vmem:[%s2414 + $0x64] sm:$0xf]
        %v2441 = vld [vmem:[%s2414 + $0x68] sm:$0xf]
        %v2442 = vld [vmem:[%s2414 + $0x6c] sm:$0xf]
        %v2443 = vld [vmem:[%s2414 + $0x70] sm:$0xf]
        %v2444 = vld [vmem:[%s2414 + $0x74] sm:$0xf]
        %v2445 = vld [vmem:[%s2414 + $0x78] sm:$0xf]
        %v2446 = vld [vmem:[%s2414 + $0x7c] sm:$0xf]
        %v2463 = vunpack.c.l.b16 %v2398
        %v2464 = vunpack.c.h.b16 %v2398
        %v2465 = vunpack.c.l.b16 %v2399
        %v2466 = vunpack.c.h.b16 %v2399
        %v2467 = vunpack.c.l.b16 %v2400
        %v2468 = vunpack.c.h.b16 %v2400
        %v2469 = vunpack.c.l.b16 %v2401
        %v2470 = vunpack.c.h.b16 %v2401
        %v2471 = vunpack.c.l.b16 %v2402
        %v2472 = vunpack.c.h.b16 %v2402
        %v2473 = vunpack.c.l.b16 %v2403
        %v2474 = vunpack.c.h.b16 %v2403
        %v2475 = vunpack.c.l.b16 %v2404
        %v2476 = vunpack.c.h.b16 %v2404
        %v2477 = vunpack.c.l.b16 %v2405
        %v2478 = vunpack.c.h.b16 %v2405
        %v2479 = vunpack.c.l.b16 %v2406
        %v2480 = vunpack.c.h.b16 %v2406
        %v2481 = vunpack.c.l.b16 %v2407
        %v2482 = vunpack.c.h.b16 %v2407
        %v2483 = vunpack.c.l.b16 %v2408
        %v2484 = vunpack.c.h.b16 %v2408
        %v2485 = vunpack.c.l.b16 %v2409
        %v2486 = vunpack.c.h.b16 %v2409
        %v2487 = vunpack.c.l.b16 %v2410
        %v2488 = vunpack.c.h.b16 %v2410
        %v2489 = vunpack.c.l.b16 %v2411
        %v2490 = vunpack.c.h.b16 %v2411
        %v2491 = vunpack.c.l.b16 %v2412
        %v2492 = vunpack.c.h.b16 %v2412
        %v2493 = vunpack.c.l.b16 %v2413
        %v2494 = vunpack.c.h.b16 %v2413
        %v2495 = vpack.c.b16 %v2465, %v2463
        %v2496 = vpack.c.b16 %v2466, %v2464
        %v2497 = vpack.c.b16 %v2469, %v2467
        %v2498 = vpack.c.b16 %v2470, %v2468
        %v2499 = vpack.c.b16 %v2473, %v2471
        %v2500 = vpack.c.b16 %v2474, %v2472
        %v2501 = vpack.c.b16 %v2477, %v2475
        %v2502 = vpack.c.b16 %v2478, %v2476
        %v2503 = vpack.c.b16 %v2481, %v2479
        %v2504 = vpack.c.b16 %v2482, %v2480
        %v2505 = vpack.c.b16 %v2485, %v2483
        %v2506 = vpack.c.b16 %v2486, %v2484
        %v2507 = vpack.c.b16 %v2489, %v2487
        %v2508 = vpack.c.b16 %v2490, %v2488
        %v2509 = vpack.c.b16 %v2493, %v2491
        %v2510 = vpack.c.b16 %v2494, %v2492
        %v2559 = vunpack.c.l.b16 %v2415
        %v2560 = vunpack.c.l.b16 %v2416
        %v2561 = vunpack.c.l.b16 %v2417
        %v2562 = vunpack.c.l.b16 %v2418
        %v2563 = vunpack.c.l.b16 %v2419
        %v2564 = vunpack.c.l.b16 %v2420
        %v2565 = vunpack.c.l.b16 %v2421
        %v2566 = vunpack.c.l.b16 %v2422
        %v2567 = vunpack.c.l.b16 %v2423
        %v2568 = vunpack.c.l.b16 %v2424
        %v2569 = vunpack.c.l.b16 %v2425
        %v2570 = vunpack.c.l.b16 %v2426
        %v2571 = vunpack.c.l.b16 %v2427
        %v2572 = vunpack.c.l.b16 %v2428
        %v2573 = vunpack.c.l.b16 %v2429
        %v2574 = vunpack.c.l.b16 %v2430
        %v2575 = vunpack.c.l.b16 %v2431
        %v2576 = vunpack.c.l.b16 %v2432
        %v2577 = vunpack.c.l.b16 %v2433
        %v2578 = vunpack.c.l.b16 %v2434
        %v2579 = vunpack.c.l.b16 %v2435
        %v2580 = vunpack.c.l.b16 %v2436
        %v2581 = vunpack.c.l.b16 %v2437
        %v2582 = vunpack.c.l.b16 %v2438
        %v2583 = vunpack.c.l.b16 %v2439
        %v2584 = vunpack.c.l.b16 %v2440
        %v2585 = vunpack.c.l.b16 %v2441
        %v2586 = vunpack.c.l.b16 %v2442
        %v2587 = vunpack.c.l.b16 %v2443
        %v2588 = vunpack.c.l.b16 %v2444
        %v2589 = vunpack.c.l.b16 %v2445
        %v2590 = vunpack.c.l.b16 %v2446
        %v2591 = vpack.c.b16 %v2560, %v2559
        %v2592 = vpack.c.b16 %v2562, %v2561
        %v2593 = vpack.c.b16 %v2564, %v2563
        %v2594 = vpack.c.b16 %v2566, %v2565
        %v2595 = vpack.c.b16 %v2568, %v2567
        %v2596 = vpack.c.b16 %v2570, %v2569
        %v2597 = vpack.c.b16 %v2572, %v2571
        %v2598 = vpack.c.b16 %v2574, %v2573
        %v2599 = vpack.c.b16 %v2576, %v2575
        %v2600 = vpack.c.b16 %v2578, %v2577
        %v2601 = vpack.c.b16 %v2580, %v2579
        %v2602 = vpack.c.b16 %v2582, %v2581
        %v2603 = vpack.c.b16 %v2584, %v2583
        %v2604 = vpack.c.b16 %v2586, %v2585
        %v2605 = vpack.c.b16 %v2588, %v2587
        %v2606 = vpack.c.b16 %v2590, %v2589
        %2623 = vmatprep.subr.bf16.mxu0 0
        %2624 = vmatpush1.bf16.msra.mxu0 %v2591
        %2625 = vmatprep.subr.bf16.mxu0 0
        %2626 = vmatpush1.bf16.msra.mxu0 %v2592
        %2627 = vmatprep.subr.bf16.mxu0 0
        %2628 = vmatpush1.bf16.msra.mxu0 %v2593
        %2629 = vmatprep.subr.bf16.mxu0 0
        %2630 = vmatpush1.bf16.msra.mxu0 %v2594
        %2631 = vmatprep.subr.bf16.mxu0 0
        %2632 = vmatpush1.bf16.msra.mxu0 %v2595
        %2633 = vmatprep.subr.bf16.mxu0 0
        %2634 = vmatpush1.bf16.msra.mxu0 %v2596
        %2635 = vmatprep.subr.bf16.mxu0 0
        %2636 = vmatpush1.bf16.msra.mxu0 %v2597
        %2637 = vmatprep.subr.bf16.mxu0 0
        %2638 = vmatpush1.bf16.msra.mxu0 %v2598
        %2639 = vmatprep.subr.bf16.mxu0 0
        %2640 = vmatpush1.bf16.msra.mxu0 %v2599
        %2641 = vmatprep.subr.bf16.mxu0 0
        %2642 = vmatpush1.bf16.msra.mxu0 %v2600
        %2643 = vmatprep.subr.bf16.mxu0 0
        %2644 = vmatpush1.bf16.msra.mxu0 %v2601
        %2645 = vmatprep.subr.bf16.mxu0 0
        %2646 = vmatpush1.bf16.msra.mxu0 %v2602
        %2647 = vmatprep.subr.bf16.mxu0 0
        %2648 = vmatpush1.bf16.msra.mxu0 %v2603
        %2649 = vmatprep.subr.bf16.mxu0 0
        %2650 = vmatpush1.bf16.msra.mxu0 %v2604
        %2651 = vmatprep.subr.bf16.mxu0 0
        %2652 = vmatpush1.bf16.msra.mxu0 %v2605
        %2653 = vmatprep.subr.bf16.mxu0 0
        %2654 = vmatpush1.bf16.msra.mxu0 %v2606
        %2655 = vmatprep.mubr.bf16.mxu0 %v2496
        %2656 = vmatmul.mubr.bf16.gmra.mrb[0].mxu0 %v2495
        %v2657 = vpop.f32.mrb[0].mxu0
        %v2658 = vadd.f32 0.0, %v2657
        %v2659 = vpop.f32.mrb[0].mxu0
        %v2660 = vpop.f32.mrb[0].mxu0
        %v2661 = vadd.f32 0.0, %v2660
        %v2662 = vpop.f32.mrb[0].mxu0
        %2663 = vmatprep.mubr.bf16.mxu0 %v2498
        %2664 = vmatmul.mubr.bf16.gmra.mrb[0].mxu0 %v2497
        %v2665 = vpop.f32.mrb[0].mxu0
        %v2666 = vadd.f32 0.0, %v2665
        %v2667 = vpop.f32.mrb[0].mxu0
        %v2668 = vpop.f32.mrb[0].mxu0
        %v2669 = vadd.f32 0.0, %v2668
        %v2670 = vpop.f32.mrb[0].mxu0
        %2671 = vmatprep.mubr.bf16.mxu0 %v2500
        %2672 = vmatmul.mubr.bf16.gmra.mrb[0].mxu0 %v2499
        %v2673 = vpop.f32.mrb[0].mxu0
        %v2674 = vadd.f32 0.0, %v2673
        %v2675 = vpop.f32.mrb[0].mxu0
        %v2676 = vpop.f32.mrb[0].mxu0
        %v2677 = vadd.f32 0.0, %v2676
        %v2678 = vpop.f32.mrb[0].mxu0
        %2679 = vmatprep.mubr.bf16.mxu0 %v2502
        %2680 = vmatmul.mubr.bf16.gmra.mrb[0].mxu0 %v2501
        %v2681 = vpop.f32.mrb[0].mxu0
        %v2682 = vadd.f32 0.0, %v2681
        %v2683 = vpop.f32.mrb[0].mxu0
        %v2684 = vpop.f32.mrb[0].mxu0
        %v2685 = vadd.f32 0.0, %v2684
        %v2686 = vpop.f32.mrb[0].mxu0
        %2687 = vmatprep.mubr.bf16.mxu0 %v2504
        %2688 = vmatmul.mubr.bf16.gmra.mrb[0].mxu0 %v2503
        %v2689 = vpop.f32.mrb[0].mxu0
        %v2690 = vadd.f32 0.0, %v2689
        %v2691 = vpop.f32.mrb[0].mxu0
        %v2692 = vpop.f32.mrb[0].mxu0
        %v2693 = vadd.f32 0.0, %v2692
        %v2694 = vpop.f32.mrb[0].mxu0
        %2695 = vmatprep.mubr.bf16.mxu0 %v2506
        %2696 = vmatmul.mubr.bf16.gmra.mrb[0].mxu0 %v2505
        %v2697 = vpop.f32.mrb[0].mxu0
        %v2698 = vadd.f32 0.0, %v2697
        %v2699 = vpop.f32.mrb[0].mxu0
        %v2700 = vpop.f32.mrb[0].mxu0
        %v2701 = vadd.f32 0.0, %v2700
        %v2702 = vpop.f32.mrb[0].mxu0
        %2703 = vmatprep.mubr.bf16.mxu0 %v2508
        %2704 = vmatmul.mubr.bf16.gmra.mrb[0].mxu0 %v2507
        %v2705 = vpop.f32.mrb[0].mxu0
        %v2706 = vadd.f32 0.0, %v2705
        %v2707 = vpop.f32.mrb[0].mxu0
        %v2708 = vpop.f32.mrb[0].mxu0
        %v2709 = vadd.f32 0.0, %v2708
        %v2710 = vpop.f32.mrb[0].mxu0
        %2711 = vmatprep.mubr.bf16.mxu0 %v2510
        %2712 = vmatmul.mubr.bf16.gmra.mrb[0].mxu0 %v2509
        %v2713 = vpop.f32.mrb[0].mxu0
        %v2714 = vadd.f32 0.0, %v2713
        %v2715 = vpop.f32.mrb[0].mxu0
        %v2716 = vpop.f32.mrb[0].mxu0
        %v2717 = vadd.f32 0.0, %v2716
        %v2718 = vpop.f32.mrb[0].mxu0
        %2719 = vdwg.mxu0
        %v2720 = vld [vmem:[#allocation2] sm:$0xff]
        %v2721 = vld [vmem:[#allocation2 + $0x8] sm:$0xff]
        %v2722 = vld [vmem:[#allocation2 + $0x10] sm:$0xff]
        %v2723 = vld [vmem:[#allocation2 + $0x18] sm:$0xff]
        %v2724 = vld [vmem:[#allocation2 + $0x20] sm:$0xff]
        %v2725 = vld [vmem:[#allocation2 + $0x28] sm:$0xff]
        %v2726 = vld [vmem:[#allocation2 + $0x30] sm:$0xff]
        %v2727 = vld [vmem:[#allocation2 + $0x38] sm:$0xff]
        %v2728 = vld [vmem:[#allocation2 + $0x40] sm:$0xff]
        %v2729 = vld [vmem:[#allocation2 + $0x48] sm:$0xff]
        %v2730 = vld [vmem:[#allocation2 + $0x50] sm:$0xff]
        %v2731 = vld [vmem:[#allocation2 + $0x58] sm:$0xff]
        %v2732 = vld [vmem:[#allocation2 + $0x60] sm:$0xff]
        %v2733 = vld [vmem:[#allocation2 + $0x68] sm:$0xff]
        %v2734 = vld [vmem:[#allocation2 + $0x70] sm:$0xff]
        %v2735 = vld [vmem:[#allocation2 + $0x78] sm:$0xff]
        %v2736 = vadd.f32 %v2720, %v2658
        %v2737 = vadd.f32 %v2721, %v2661
        %v2738 = vadd.f32 %v2722, %v2666
        %v2739 = vadd.f32 %v2723, %v2669
        %v2740 = vadd.f32 %v2724, %v2674
        %v2741 = vadd.f32 %v2725, %v2677
        %v2742 = vadd.f32 %v2726, %v2682
        %v2743 = vadd.f32 %v2727, %v2685
        %v2744 = vadd.f32 %v2728, %v2690
        %v2745 = vadd.f32 %v2729, %v2693
        %v2746 = vadd.f32 %v2730, %v2698
        %v2747 = vadd.f32 %v2731, %v2701
        %v2748 = vadd.f32 %v2732, %v2706
        %v2749 = vadd.f32 %v2733, %v2709
        %v2750 = vadd.f32 %v2734, %v2714
        %v2751 = vadd.f32 %v2735, %v2717
        %2752 = vst [vmem:[#allocation2] sm:$0xff] %v2736
        %2753 = vst [vmem:[#allocation2 + $0x8] sm:$0xff] %v2737
        %2754 = vst [vmem:[#allocation2 + $0x10] sm:$0xff] %v2738
        %2755 = vst [vmem:[#allocation2 + $0x18] sm:$0xff] %v2739
        %2756 = vst [vmem:[#allocation2 + $0x20] sm:$0xff] %v2740
        %2757 = vst [vmem:[#allocation2 + $0x28] sm:$0xff] %v2741
        %2758 = vst [vmem:[#allocation2 + $0x30] sm:$0xff] %v2742
        %2759 = vst [vmem:[#allocation2 + $0x38] sm:$0xff] %v2743
        %2760 = vst [vmem:[#allocation2 + $0x40] sm:$0xff] %v2744
        %2761 = vst [vmem:[#allocation2 + $0x48] sm:$0xff] %v2745
        %2762 = vst [vmem:[#allocation2 + $0x50] sm:$0xff] %v2746
        %2763 = vst [vmem:[#allocation2 + $0x58] sm:$0xff] %v2747
        %2764 = vst [vmem:[#allocation2 + $0x60] sm:$0xff] %v2748
        %2765 = vst [vmem:[#allocation2 + $0x68] sm:$0xff] %v2749
        %2766 = vst [vmem:[#allocation2 + $0x70] sm:$0xff] %v2750
        %2767 = vst [vmem:[#allocation2 + $0x78] sm:$0xff] %v2751
        %v2768 = vld [vmem:[#allocation2] sm:$0xff]
        %v2769 = vld [vmem:[#allocation2 + $0x8] sm:$0xff]
        %v2770 = vld [vmem:[#allocation2 + $0x10] sm:$0xff]
        %v2771 = vld [vmem:[#allocation2 + $0x18] sm:$0xff]
        %v2772 = vld [vmem:[#allocation2 + $0x20] sm:$0xff]
        %v2773 = vld [vmem:[#allocation2 + $0x28] sm:$0xff]
        %v2774 = vld [vmem:[#allocation2 + $0x30] sm:$0xff]
        %v2775 = vld [vmem:[#allocation2 + $0x38] sm:$0xff]
        %v2776 = vld [vmem:[#allocation2 + $0x40] sm:$0xff]
        %v2777 = vld [vmem:[#allocation2 + $0x48] sm:$0xff]
        %v2778 = vld [vmem:[#allocation2 + $0x50] sm:$0xff]
        %v2779 = vld [vmem:[#allocation2 + $0x58] sm:$0xff]
        %v2780 = vld [vmem:[#allocation2 + $0x60] sm:$0xff]
        %v2781 = vld [vmem:[#allocation2 + $0x68] sm:$0xff]
        %v2782 = vld [vmem:[#allocation2 + $0x70] sm:$0xff]
        %v2783 = vld [vmem:[#allocation2 + $0x78] sm:$0xff]
        %v2784 = vld [vmem:[%s2] sm:$0x1]
        %v2786 = vlaneseq
        %v2787 = vshrl.u32 %v2786, 7
        %v2788 = vsub.s32 0, %v2787
        %v2789 = vrot.slane %v2784, %v2788
        %v2791 = vadd.f32 %v2768, %v2789
        %v2792 = vadd.f32 %v2769, %v2789
        %v2793 = vadd.f32 %v2770, %v2789
        %v2794 = vadd.f32 %v2771, %v2789
        %v2795 = vadd.f32 %v2772, %v2789
        %v2796 = vadd.f32 %v2773, %v2789
        %v2797 = vadd.f32 %v2774, %v2789
        %v2798 = vadd.f32 %v2775, %v2789
        %v2799 = vadd.f32 %v2776, %v2789
        %v2800 = vadd.f32 %v2777, %v2789
        %v2801 = vadd.f32 %v2778, %v2789
        %v2802 = vadd.f32 %v2779, %v2789
        %v2803 = vadd.f32 %v2780, %v2789
        %v2804 = vadd.f32 %v2781, %v2789
        %v2805 = vadd.f32 %v2782, %v2789
        %v2806 = vadd.f32 %v2783, %v2789
        %2807 = vst [vmem:[%s203] sm:$0xff] %v2791
        %2808 = vst [vmem:[%s203 + $0x8] sm:$0xff] %v2792
        %2809 = vst [vmem:[%s203 + $0x10] sm:$0xff] %v2793
        %2810 = vst [vmem:[%s203 + $0x18] sm:$0xff] %v2794
        %2811 = vst [vmem:[%s203 + $0x20] sm:$0xff] %v2795
        %2812 = vst [vmem:[%s203 + $0x28] sm:$0xff] %v2796
        %2813 = vst [vmem:[%s203 + $0x30] sm:$0xff] %v2797
        %2814 = vst [vmem:[%s203 + $0x38] sm:$0xff] %v2798
        %2815 = vst [vmem:[%s203 + $0x40] sm:$0xff] %v2799
        %2816 = vst [vmem:[%s203 + $0x48] sm:$0xff] %v2800
        %2817 = vst [vmem:[%s203 + $0x50] sm:$0xff] %v2801
        %2818 = vst [vmem:[%s203 + $0x58] sm:$0xff] %v2802
        %2819 = vst [vmem:[%s203 + $0x60] sm:$0xff] %v2803
        %2820 = vst [vmem:[%s203 + $0x68] sm:$0xff] %v2804
        %2821 = vst [vmem:[%s203 + $0x70] sm:$0xff] %v2805
        %2822 = vst [vmem:[%s203 + $0x78] sm:$0xff] %v2806
        %s2823 = sand.u32 %s97, 1
        %s2824 = scalar_lea.sflag [#allocation5], %s2823
        %s2825 = sand.u32 %s97, 1
        %s2826 = smul.addr %s2825, 128
        %s2827 = scalar_lea.vmem [#allocation8], %s2826
        // Predicated region
        $region41: #{tpu_custom_call.1} parent=31 // pred_check
          %p2828 = pneg %p107
        $region42: #{tpu_custom_call.1} parent=31 // pred_check_branch
          %2830 = sbr.rel (%p2828) target = $region44
        $region43: #{tpu_custom_call.1} parent=31 // pred_region
          %s2832 = ssub.s32 2048, 2048
          %2833 = vsyncadd %s2824, %s2832
          %s2834 = smul.addr %s21, 16
          %s2835 = smul.addr %s2834, 128
          %s2836 = scalar_lea.hbm %s3, %s2835
          %s2837 = sshll.u32 %s2827, 4
          %s2838 = int_to_ptr.vmem [resolvable:$true] %s2837
          %2843 = dma.vmem_to_hbm [thread:$0]  %s2838, 2048, %s2836, %s2824, 128, 128, 8
        $region44: #{tpu_custom_call.1} parent=31 // pred_fallthru
          _
      $region32: #{tpu_custom_call.1} parent=5 // pred_fallthru
        _
      %p2844 = scmp.le.s32.totalorder 2, %s16
      // Predicated region
      $region45: #{tpu_custom_call.1} parent=5 // pred_check
        %p2845 = pneg %p2844
      $region46: #{tpu_custom_call.1} parent=5 // pred_check_branch
        %2847 = sbr.rel (%p2845) target = $region48
      $region47: #{tpu_custom_call.1} parent=5 // pred_region
        %s2848 = ssub.s32 %s16, 2
        // Predicated region
        $region49: #{tpu_custom_call.1} parent=47 // pred_check
          %p2849 = pneg %p113
        $region50: #{tpu_custom_call.1} parent=47 // pred_check_branch
          %2851 = sbr.rel (%p2849) target = $region52
        $region51: #{tpu_custom_call.1} parent=47 // pred_region
          %s2852 = sand.u32 %s98, 1
          %s2853 = scalar_lea.sflag [#allocation5], %s2852
          %s2854 = sand.u32 %s98, 1
          %s2855 = smul.addr %s2854, 128
          %s2856 = scalar_lea.vmem [#allocation8], %s2855
          %2857 = dma.done %s2853, 2048
        $region52: #{tpu_custom_call.1} parent=47 // pred_fallthru
          _
      $region48: #{tpu_custom_call.1} parent=5 // pred_fallthru
        _
    $region6: #{tpu_custom_call.1} parent=1 // loop_footer
      %s20 = sadd.s32 1, %s16
    $region7: #{tpu_custom_call.1} parent=1 // loop_footer_branch
      %15 = sbr.rel target = $region3
    $region8: #{tpu_custom_call.1} parent=1 // loop_exit
      _
    %2858 = vsyncpa [#allocation4], 1
    %s2859 = scalar_lea.sflag [#allocation4], 1
    %2860 = vsyncpa %s2859, 1
    %2861 = vsyncpa [#allocation7], 1
    %2862 = vsyncpa [#allocation5], 1
    %s2863 = scalar_lea.sflag [#allocation5], 1
    %2864 = vsyncpa %s2863, 1

</llo_original>
